<compile_context>
chip_gen: v7x
topology: tpu7x:2x2x1
jax: 0.10.0
libtpu: 0.0.40
codegen_flags: <defaults>
</compile_context>

<pallas_src>
import math
import functools

import jax
import jax.numpy as jnp
from jax.experimental import pallas as pl
from jax.experimental.pallas import tpu as pltpu

D_MODEL = 8
NUM_HEADS = 2
D_FF = 16
HEAD = D_MODEL // NUM_HEADS
EPS = 1e-6

# Packed-vector layout (one (8, 3*D_MODEL) f32 array):
#   row 0: [bq | bk | bv]            (3*D)
#   row 1: bo   (D, zero-padded)
#   row 2: b1   (D_FF, zero-padded)
#   row 3: b2   (D, zero-padded)
#   row 4: g1   row 5: be1   row 6: g2   row 7: be2
VEC_COLS = 3 * D_MODEL
assert VEC_COLS >= D_FF


def _layer_norm(x, gamma, beta):
    # torch custom LayerNorm: unbiased std (ddof=1), divide by (std + eps).
    mean = jnp.mean(x, axis=-1, keepdims=True)
    diff = x - mean
    var = jnp.sum(diff * diff, axis=-1, keepdims=True) * (1.0 / (x.shape[-1] - 1))
    inv = pl.reciprocal(jnp.sqrt(var) + EPS, approx=False)   # one reciprocal per row
    return diff * inv * gamma + beta


def encoder_layer_kernel(x_ref, wqkv_ref, wo_ref, w1_ref, w2_ref, vecs_ref, o_ref,
                         *, tb, seq):
    D = D_MODEL
    x = x_ref[...].astype(jnp.float32)                        # (tb*seq, D)

    # --- fused QKV projection: single MXU push with N = 3*D ---
    qkv = jnp.dot(x, wqkv_ref[...], preferred_element_type=jnp.float32) \
        + vecs_ref[0:1, :]                                    # (tb*seq, 3D)

    def split_heads(t):                                       # (tb*seq, D) -> (tb*H, seq, HEAD)
        return (t.reshape(tb, seq, NUM_HEADS, HEAD)
                 .transpose(0, 2, 1, 3)
                 .reshape(tb * NUM_HEADS, seq, HEAD))

    q = split_heads(qkv[:, 0 * D:1 * D])
    k = split_heads(qkv[:, 1 * D:2 * D])
    v = split_heads(qkv[:, 2 * D:3 * D])

    # --- head-batched attention (heads folded into the batch dim) ---
    scale = 1.0 / math.sqrt(HEAD)
    scores = jnp.einsum("bqd,bkd->bqk", q, k,
                        preferred_element_type=jnp.float32) * scale   # (tb*H, S, S)
    scores = scores - jnp.max(scores, axis=-1, keepdims=True)
    e = jnp.exp(scores)
    probs = e * pl.reciprocal(jnp.sum(e, axis=-1, keepdims=True), approx=False)
    ctx = jnp.einsum("bqk,bkd->bqd", probs, v,
                     preferred_element_type=jnp.float32)              # (tb*H, S, HEAD)

    attn = (ctx.reshape(tb, NUM_HEADS, seq, HEAD)
               .transpose(0, 2, 1, 3)
               .reshape(tb * seq, D))
    attn = jnp.dot(attn, wo_ref[...], preferred_element_type=jnp.float32) \
        + vecs_ref[1:2, 0:D]

    # residual + norm1 (dropout == identity in eval mode)
    x1 = _layer_norm(x + attn, vecs_ref[4:5, 0:D], vecs_ref[5:6, 0:D])

    # --- position-wise feedforward ---
    h1 = jnp.dot(x1, w1_ref[...], preferred_element_type=jnp.float32) \
        + vecs_ref[2:3, 0:D_FF]
    h1 = jnp.maximum(h1, 0.0)
    ff = jnp.dot(h1, w2_ref[...], preferred_element_type=jnp.float32) \
        + vecs_ref[3:4, 0:D]

    # residual + norm2
    x2 = _layer_norm(x1 + ff, vecs_ref[6:7, 0:D], vecs_ref[7:8, 0:D])
    o_ref[...] = x2.astype(o_ref.dtype)


def _pick_block_b(batch, seq):
    # Block as many batch elements as possible, but:
    #  * keep activation rows per block modest (sized against v7x's 64 MiB VMEM
    #    with plenty of headroom),
    #  * keep >= 2 "parallel" grid steps when batch allows, so both v7x
    #    TensorCores are used.
    max_rows = 2048
    tb = max(1, min(batch, max_rows // seq))
    if batch >= 2:
        tb = min(tb, max(1, batch // 2))
    while batch % tb != 0:
        tb -= 1
    return tb


def prepare_params(p):
    """One-time host-side fusion/packing of the per-tensor parameter dict."""
    wqkv = jnp.concatenate([p["wq"], p["wk"], p["wv"]], axis=1)   # (D, 3D)

    def row(v):
        v = jnp.ravel(v).astype(jnp.float32)
        return jnp.pad(v, (0, VEC_COLS - v.shape[0]))

    vecs = jnp.stack([
        row(jnp.concatenate([jnp.ravel(p["bq"]), jnp.ravel(p["bk"]), jnp.ravel(p["bv"])])),
        row(p["bo"]), row(p["b1"]), row(p["b2"]),
        row(p["g1"]), row(p["be1"]), row(p["g2"]), row(p["be2"]),
    ])                                                            # (8, 3D)
    return dict(wqkv=wqkv, wo=p["wo"], w1=p["w1"], w2=p["w2"], vecs=vecs)


def encoder_layer(x, prepped, *, block_b=None):
    B, S, D = x.shape
    assert D == D_MODEL
    tb = block_b if block_b is not None else _pick_block_b(B, S)
    assert B % tb == 0
    assert (tb * S) % 8 == 0 or tb * S == B * S, "sublane tiling constraint"

    # Flatten batch*seq into the sublane axis -> one tall (TB*S, D) slab per step.
    x2d = x.reshape(B * S, D)

    kernel = functools.partial(encoder_layer_kernel, tb=tb, seq=S)
    const2d = lambda shape: pl.BlockSpec(shape, lambda b: (0, 0))

    out = pl.pallas_call(
        kernel,
        out_shape=jax.ShapeDtypeStruct((B * S, D), x.dtype),
        grid_spec=pltpu.PrefetchScalarGridSpec(
            num_scalar_prefetch=0,
            grid=(B // tb,),
            in_specs=[
                pl.BlockSpec((tb * S, D), lambda b: (b, 0)),
                const2d(prepped["wqkv"].shape),
                const2d(prepped["wo"].shape),
                const2d(prepped["w1"].shape),
                const2d(prepped["w2"].shape),
                const2d(prepped["vecs"].shape),
            ],
            out_specs=pl.BlockSpec((tb * S, D), lambda b: (b, 0)),
        ),
        compiler_params=pltpu.CompilerParams(
            dimension_semantics=("parallel",),
        ),
    )(x2d, prepped["wqkv"], prepped["wo"], prepped["w1"], prepped["w2"], prepped["vecs"])
    return out.reshape(B, S, D)


def make_params(key):
    ks = jax.random.split(key, 8)

    def lin(k, fan_in, fan_out):
        bound = 1.0 / math.sqrt(fan_in)
        kw, kb = jax.random.split(k)
        w = jax.random.uniform(kw, (fan_in, fan_out), jnp.float32, -bound, bound)
        b = jax.random.uniform(kb, (1, fan_out), jnp.float32, -bound, bound)
        return w, b

    wq, bq = lin(ks[0], D_MODEL, D_MODEL)
    wk, bk = lin(ks[1], D_MODEL, D_MODEL)
    wv, bv = lin(ks[2], D_MODEL, D_MODEL)
    wo, bo = lin(ks[3], D_MODEL, D_MODEL)
    w1, b1 = lin(ks[4], D_MODEL, D_FF)
    w2, b2 = lin(ks[5], D_FF, D_MODEL)
    return dict(
        wq=wq, bq=bq, wk=wk, bk=bk, wv=wv, bv=bv, wo=wo, bo=bo,
        w1=w1, b1=b1, w2=w2, b2=b2,
        g1=jnp.ones((1, D_MODEL), jnp.float32), be1=jnp.zeros((1, D_MODEL), jnp.float32),
        g2=jnp.ones((1, D_MODEL), jnp.float32), be2=jnp.zeros((1, D_MODEL), jnp.float32),
    )


def encoder_layer_ref(x, p):
    """Pure-JAX reference mirroring the torch forward (eval mode)."""
    def ln(x, g, b):
        mean = jnp.mean(x, axis=-1, keepdims=True)
        var = jnp.sum((x - mean) ** 2, axis=-1, keepdims=True) / (x.shape[-1] - 1)
        return (x - mean) / (jnp.sqrt(var) + EPS) * g + b

    B, S, D = x.shape
    q = x @ p["wq"] + p["bq"]
    k = x @ p["wk"] + p["bk"]
    v = x @ p["wv"] + p["bv"]
    q = q.reshape(B, S, NUM_HEADS, HEAD).transpose(0, 2, 1, 3)
    k = k.reshape(B, S, NUM_HEADS, HEAD).transpose(0, 2, 1, 3)
    v = v.reshape(B, S, NUM_HEADS, HEAD).transpose(0, 2, 1, 3)
    scores = jnp.einsum("bhqd,bhkd->bhqk", q, k) / math.sqrt(HEAD)
    probs = jax.nn.softmax(scores, axis=-1)
    attn = jnp.einsum("bhqk,bhkd->bhqd", probs, v)
    attn = attn.transpose(0, 2, 1, 3).reshape(B, S, D)
    attn = attn @ p["wo"] + p["bo"]
    x1 = ln(x + attn, p["g1"], p["be1"])
    ff = jnp.maximum(x1 @ p["w1"] + p["b1"], 0.0) @ p["w2"] + p["b2"]
    return ln(x1 + ff, p["g2"], p["be2"])


if __name__ == "__main__":
    key = jax.random.PRNGKey(0)
    kx, kp = jax.random.split(key)
    B, S = 2, 8
    x = jax.random.normal(kx, (B, S, D_MODEL), jnp.float32)

    params = make_params(kp)
    prepped = prepare_params(params)

    out = jax.block_until_ready(encoder_layer(x, prepped))
    ref = encoder_layer_ref(x, params)

    assert out.shape == (B, S, D_MODEL)
    max_err = float(jnp.max(jnp.abs(out - ref)))
    assert jnp.allclose(out, ref, atol=1e-5, rtol=1e-5), max_err
    print("KERNEL_OK")
</pallas_src>

<mosaic_0001>
module attributes {stable_mosaic.version = 11 : i64} {
  func.func @encoder_layer_kernel(%arg0: i32, %arg1: memref<8x8xf32, #tpu.memory_space<vmem>>, %arg2: memref<8x24xf32, #tpu.memory_space<vmem>>, %arg3: memref<8x8xf32, #tpu.memory_space<vmem>>, %arg4: memref<8x16xf32, #tpu.memory_space<vmem>>, %arg5: memref<16x8xf32, #tpu.memory_space<vmem>>, %arg6: memref<8x24xf32, #tpu.memory_space<vmem>>, %arg7: memref<8x8xf32, #tpu.memory_space<vmem>>) attributes {dimension_semantics = [#tpu.dimension_semantics<parallel>], iteration_bounds = array<i64: 2>, scalar_prefetch = 0 : i64, scratch_operands = 0 : i64, tpu.core_type = #tpu.core_type<tc>, window_params = [{transform_indices = @transform_0, window_bounds = array<i64: 8, 8>}, {pipeline_mode = #tpu.pipeline_mode<synchronous>, transform_indices = @transform_1, window_bounds = array<i64: 8, 24>}, {pipeline_mode = #tpu.pipeline_mode<synchronous>, transform_indices = @transform_2, window_bounds = array<i64: 8, 8>}, {pipeline_mode = #tpu.pipeline_mode<synchronous>, transform_indices = @transform_3, window_bounds = array<i64: 8, 16>}, {pipeline_mode = #tpu.pipeline_mode<synchronous>, transform_indices = @transform_4, window_bounds = array<i64: 16, 8>}, {pipeline_mode = #tpu.pipeline_mode<synchronous>, transform_indices = @transform_5, window_bounds = array<i64: 8, 24>}, {transform_indices = @transform_6, window_bounds = array<i64: 8, 8>}]} {
    %c0 = arith.constant 0 : index
    %c0_0 = arith.constant 0 : index
    %0 = vector.load %arg1[%c0, %c0_0] : memref<8x8xf32, #tpu.memory_space<vmem>>, vector<8x8xf32>
    %c0_1 = arith.constant 0 : index
    %c0_2 = arith.constant 0 : index
    %1 = vector.load %arg2[%c0_1, %c0_2] : memref<8x24xf32, #tpu.memory_space<vmem>>, vector<8x24xf32>
    %cst = arith.constant dense<0.000000e+00> : vector<8x24xf32>
    %2 = tpu.matmul %0, %1, %cst {dimension_numbers = #tpu.dot_dimension_numbers<[1], [0], [0], [1], [0, 0, 1, 1], [], []>} : vector<8x8xf32>, vector<8x24xf32>, vector<8x24xf32> -> vector<8x24xf32>
    %c0_3 = arith.constant 0 : index
    %c0_4 = arith.constant 0 : index
    %3 = vector.load %arg6[%c0_3, %c0_4] : memref<8x24xf32, #tpu.memory_space<vmem>>, vector<1x24xf32>
    %4 = vector.broadcast %3 : vector<1x24xf32> to vector<8x24xf32>
    %5 = arith.addf %2, %4 : vector<8x24xf32>
    %6 = vector.extract_strided_slice %5 {offsets = [0, 0], sizes = [8, 8], strides = [1, 1]} : vector<8x24xf32> to vector<8x8xf32>
    %7 = vector.shape_cast %6 : vector<8x8xf32> to vector<1x8x2x4xf32>
    %8 = tpu.transpose %7, [0, 2, 1, 3] : vector<1x8x2x4xf32> -> vector<1x2x8x4xf32>
    %9 = vector.shape_cast %8 : vector<1x2x8x4xf32> to vector<2x8x4xf32>
    %10 = vector.extract_strided_slice %5 {offsets = [0, 8], sizes = [8, 8], strides = [1, 1]} : vector<8x24xf32> to vector<8x8xf32>
    %11 = vector.shape_cast %10 : vector<8x8xf32> to vector<1x8x2x4xf32>
    %12 = tpu.transpose %11, [0, 2, 1, 3] : vector<1x8x2x4xf32> -> vector<1x2x8x4xf32>
    %13 = vector.shape_cast %12 : vector<1x2x8x4xf32> to vector<2x8x4xf32>
    %14 = vector.extract_strided_slice %5 {offsets = [0, 16], sizes = [8, 8], strides = [1, 1]} : vector<8x24xf32> to vector<8x8xf32>
    %15 = vector.shape_cast %14 : vector<8x8xf32> to vector<1x8x2x4xf32>
    %16 = tpu.transpose %15, [0, 2, 1, 3] : vector<1x8x2x4xf32> -> vector<1x2x8x4xf32>
    %17 = vector.shape_cast %16 : vector<1x2x8x4xf32> to vector<2x8x4xf32>
    "tpu.trace_start"() <{level = 10 : i32, message = "bqd,bkd->bqk"}> : () -> ()
    %cst_5 = arith.constant dense<0.000000e+00> : vector<2x8x8xf32>
    %18 = tpu.matmul %9, %13, %cst_5 {dimension_numbers = #tpu.dot_dimension_numbers<[2], [2], [1], [1], [0, 0, 0, 1, 1, 1], [0], [0]>} : vector<2x8x4xf32>, vector<2x8x4xf32>, vector<2x8x8xf32> -> vector<2x8x8xf32>
    "tpu.trace_stop"() : () -> ()
    %cst_6 = arith.constant 5.000000e-01 : f32
    %19 = vector.broadcast %cst_6 : f32 to vector<2x8x8xf32>
    %20 = arith.mulf %18, %19 : vector<2x8x8xf32>
    %cst_7 = arith.constant dense<0xFF800000> : vector<2x8xf32>
    %21 = vector.multi_reduction <maximumf>, %20, %cst_7 [2] : vector<2x8x8xf32> to vector<2x8xf32>
    %22 = vector.shape_cast %21 : vector<2x8xf32> to vector<2x8x1xf32>
    %23 = vector.broadcast %22 : vector<2x8x1xf32> to vector<2x8x8xf32>
    %24 = arith.subf %20, %23 : vector<2x8x8xf32>
    %25 = math.exp %24 : vector<2x8x8xf32>
    %cst_8 = arith.constant dense<0.000000e+00> : vector<2x8xf32>
    %26 = vector.multi_reduction <add>, %25, %cst_8 [2] : vector<2x8x8xf32> to vector<2x8xf32>
    %27 = vector.shape_cast %26 : vector<2x8xf32> to vector<2x8x1xf32>
    %28 = tpu.reciprocal %27 : vector<2x8x1xf32> -> vector<2x8x1xf32>
    %29 = vector.broadcast %28 : vector<2x8x1xf32> to vector<2x8x8xf32>
    %30 = arith.mulf %25, %29 : vector<2x8x8xf32>
    "tpu.trace_start"() <{level = 10 : i32, message = "bqk,bkd->bqd"}> : () -> ()
    %cst_9 = arith.constant dense<0.000000e+00> : vector<2x8x4xf32>
    %31 = tpu.matmul %30, %17, %cst_9 {dimension_numbers = #tpu.dot_dimension_numbers<[2], [1], [1], [2], [0, 0, 0, 1, 1, 2], [0], [0]>} : vector<2x8x8xf32>, vector<2x8x4xf32>, vector<2x8x4xf32> -> vector<2x8x4xf32>
    "tpu.trace_stop"() : () -> ()
    %32 = vector.shape_cast %31 : vector<2x8x4xf32> to vector<1x2x8x4xf32>
    %33 = tpu.transpose %32, [0, 2, 1, 3] : vector<1x2x8x4xf32> -> vector<1x8x2x4xf32>
    %34 = vector.shape_cast %33 : vector<1x8x2x4xf32> to vector<8x8xf32>
    %c0_10 = arith.constant 0 : index
    %c0_11 = arith.constant 0 : index
    %35 = vector.load %arg3[%c0_10, %c0_11] : memref<8x8xf32, #tpu.memory_space<vmem>>, vector<8x8xf32>
    %cst_12 = arith.constant dense<0.000000e+00> : vector<8x8xf32>
    %36 = tpu.matmul %34, %35, %cst_12 {dimension_numbers = #tpu.dot_dimension_numbers<[1], [0], [0], [1], [0, 0, 1, 1], [], []>} : vector<8x8xf32>, vector<8x8xf32>, vector<8x8xf32> -> vector<8x8xf32>
    %c1 = arith.constant 1 : index
    %c0_13 = arith.constant 0 : index
    %37 = vector.load %arg6[%c1, %c0_13] : memref<8x24xf32, #tpu.memory_space<vmem>>, vector<1x8xf32>
    %38 = vector.broadcast %37 : vector<1x8xf32> to vector<8x8xf32>
    %39 = arith.addf %36, %38 : vector<8x8xf32>
    %40 = arith.addf %0, %39 : vector<8x8xf32>
    %c4 = arith.constant 4 : index
    %c0_14 = arith.constant 0 : index
    %41 = vector.load %arg6[%c4, %c0_14] : memref<8x24xf32, #tpu.memory_space<vmem>>, vector<1x8xf32>
    %c5 = arith.constant 5 : index
    %c0_15 = arith.constant 0 : index
    %42 = vector.load %arg6[%c5, %c0_15] : memref<8x24xf32, #tpu.memory_space<vmem>>, vector<1x8xf32>
    %cst_16 = arith.constant dense<0.000000e+00> : vector<8xf32>
    %43 = vector.multi_reduction <add>, %40, %cst_16 [1] : vector<8x8xf32> to vector<8xf32>
    %44 = vector.shape_cast %43 : vector<8xf32> to vector<8x1xf32>
    %cst_17 = arith.constant 8.000000e+00 : f32
    %45 = vector.broadcast %cst_17 : f32 to vector<8x1xf32>
    %46 = arith.divf %44, %45 : vector<8x1xf32>
    %47 = vector.broadcast %46 : vector<8x1xf32> to vector<8x8xf32>
    %48 = arith.subf %40, %47 : vector<8x8xf32>
    %49 = arith.mulf %48, %48 : vector<8x8xf32>
    %cst_18 = arith.constant dense<0.000000e+00> : vector<8xf32>
    %50 = vector.multi_reduction <add>, %49, %cst_18 [1] : vector<8x8xf32> to vector<8xf32>
    %51 = vector.shape_cast %50 : vector<8xf32> to vector<8x1xf32>
    %cst_19 = arith.constant 0.142857149 : f32
    %52 = vector.broadcast %cst_19 : f32 to vector<8x1xf32>
    %53 = arith.mulf %51, %52 : vector<8x1xf32>
    %54 = math.sqrt %53 : vector<8x1xf32>
    %cst_20 = arith.constant 9.99999997E-7 : f32
    %55 = vector.broadcast %cst_20 : f32 to vector<8x1xf32>
    %56 = arith.addf %54, %55 : vector<8x1xf32>
    %57 = tpu.reciprocal %56 : vector<8x1xf32> -> vector<8x1xf32>
    %58 = vector.broadcast %57 : vector<8x1xf32> to vector<8x8xf32>
    %59 = arith.mulf %48, %58 : vector<8x8xf32>
    %60 = vector.broadcast %41 : vector<1x8xf32> to vector<8x8xf32>
    %61 = arith.mulf %59, %60 : vector<8x8xf32>
    %62 = vector.broadcast %42 : vector<1x8xf32> to vector<8x8xf32>
    %63 = arith.addf %61, %62 : vector<8x8xf32>
    %c0_21 = arith.constant 0 : index
    %c0_22 = arith.constant 0 : index
    %64 = vector.load %arg4[%c0_21, %c0_22] : memref<8x16xf32, #tpu.memory_space<vmem>>, vector<8x16xf32>
    %cst_23 = arith.constant dense<0.000000e+00> : vector<8x16xf32>
    %65 = tpu.matmul %63, %64, %cst_23 {dimension_numbers = #tpu.dot_dimension_numbers<[1], [0], [0], [1], [0, 0, 1, 1], [], []>} : vector<8x8xf32>, vector<8x16xf32>, vector<8x16xf32> -> vector<8x16xf32>
    %c2 = arith.constant 2 : index
    %c0_24 = arith.constant 0 : index
    %66 = vector.load %arg6[%c2, %c0_24] : memref<8x24xf32, #tpu.memory_space<vmem>>, vector<1x16xf32>
    %67 = vector.broadcast %66 : vector<1x16xf32> to vector<8x16xf32>
    %68 = arith.addf %65, %67 : vector<8x16xf32>
    %cst_25 = arith.constant 0.000000e+00 : f32
    %69 = vector.broadcast %cst_25 : f32 to vector<8x16xf32>
    %70 = arith.maximumf %68, %69 : vector<8x16xf32>
    %c0_26 = arith.constant 0 : index
    %c0_27 = arith.constant 0 : index
    %71 = vector.load %arg5[%c0_26, %c0_27] : memref<16x8xf32, #tpu.memory_space<vmem>>, vector<16x8xf32>
    %cst_28 = arith.constant dense<0.000000e+00> : vector<8x8xf32>
    %72 = tpu.matmul %70, %71, %cst_28 {dimension_numbers = #tpu.dot_dimension_numbers<[1], [0], [0], [1], [0, 0, 1, 1], [], []>} : vector<8x16xf32>, vector<16x8xf32>, vector<8x8xf32> -> vector<8x8xf32>
    %c3 = arith.constant 3 : index
    %c0_29 = arith.constant 0 : index
    %73 = vector.load %arg6[%c3, %c0_29] : memref<8x24xf32, #tpu.memory_space<vmem>>, vector<1x8xf32>
    %74 = vector.broadcast %73 : vector<1x8xf32> to vector<8x8xf32>
    %75 = arith.addf %72, %74 : vector<8x8xf32>
    %76 = arith.addf %63, %75 : vector<8x8xf32>
    %c6 = arith.constant 6 : index
    %c0_30 = arith.constant 0 : index
    %77 = vector.load %arg6[%c6, %c0_30] : memref<8x24xf32, #tpu.memory_space<vmem>>, vector<1x8xf32>
    %c7 = arith.constant 7 : index
    %c0_31 = arith.constant 0 : index
    %78 = vector.load %arg6[%c7, %c0_31] : memref<8x24xf32, #tpu.memory_space<vmem>>, vector<1x8xf32>
    %cst_32 = arith.constant dense<0.000000e+00> : vector<8xf32>
    %79 = vector.multi_reduction <add>, %76, %cst_32 [1] : vector<8x8xf32> to vector<8xf32>
    %80 = vector.shape_cast %79 : vector<8xf32> to vector<8x1xf32>
    %cst_33 = arith.constant 8.000000e+00 : f32
    %81 = vector.broadcast %cst_33 : f32 to vector<8x1xf32>
    %82 = arith.divf %80, %81 : vector<8x1xf32>
    %83 = vector.broadcast %82 : vector<8x1xf32> to vector<8x8xf32>
    %84 = arith.subf %76, %83 : vector<8x8xf32>
    %85 = arith.mulf %84, %84 : vector<8x8xf32>
    %cst_34 = arith.constant dense<0.000000e+00> : vector<8xf32>
    %86 = vector.multi_reduction <add>, %85, %cst_34 [1] : vector<8x8xf32> to vector<8xf32>
    %87 = vector.shape_cast %86 : vector<8xf32> to vector<8x1xf32>
    %cst_35 = arith.constant 0.142857149 : f32
    %88 = vector.broadcast %cst_35 : f32 to vector<8x1xf32>
    %89 = arith.mulf %87, %88 : vector<8x1xf32>
    %90 = math.sqrt %89 : vector<8x1xf32>
    %cst_36 = arith.constant 9.99999997E-7 : f32
    %91 = vector.broadcast %cst_36 : f32 to vector<8x1xf32>
    %92 = arith.addf %90, %91 : vector<8x1xf32>
    %93 = tpu.reciprocal %92 : vector<8x1xf32> -> vector<8x1xf32>
    %94 = vector.broadcast %93 : vector<8x1xf32> to vector<8x8xf32>
    %95 = arith.mulf %84, %94 : vector<8x8xf32>
    %96 = vector.broadcast %77 : vector<1x8xf32> to vector<8x8xf32>
    %97 = arith.mulf %95, %96 : vector<8x8xf32>
    %98 = vector.broadcast %78 : vector<1x8xf32> to vector<8x8xf32>
    %99 = arith.addf %97, %98 : vector<8x8xf32>
    %c0_37 = arith.constant 0 : index
    %c0_38 = arith.constant 0 : index
    %100 = vector.load %arg7[%c0_37, %c0_38] : memref<8x8xf32, #tpu.memory_space<vmem>>, vector<8x8xf32>
    tpu.vector_store %arg7[%c0_37, %c0_38], %99 {strides = array<i32>} : memref<8x8xf32, #tpu.memory_space<vmem>>, vector<8x8xf32>,
    return
  }
  func.func @transform_0(%arg0: i32) -> (i32, i32) {
    %c0_i32 = arith.constant 0 : i32
    %c0_i32_0 = arith.constant 0 : i32
    return %arg0, %c0_i32 : i32, i32
  }
  func.func @transform_1(%arg0: i32) -> (i32, i32) {
    %c0_i32 = arith.constant 0 : i32
    %c0_i32_0 = arith.constant 0 : i32
    %c0_i32_1 = arith.constant 0 : i32
    return %c0_i32, %c0_i32_0 : i32, i32
  }
  func.func @transform_2(%arg0: i32) -> (i32, i32) {
    %c0_i32 = arith.constant 0 : i32
    %c0_i32_0 = arith.constant 0 : i32
    %c0_i32_1 = arith.constant 0 : i32
    return %c0_i32, %c0_i32_0 : i32, i32
  }
  func.func @transform_3(%arg0: i32) -> (i32, i32) {
    %c0_i32 = arith.constant 0 : i32
    %c0_i32_0 = arith.constant 0 : i32
    %c0_i32_1 = arith.constant 0 : i32
    return %c0_i32, %c0_i32_0 : i32, i32
  }
  func.func @transform_4(%arg0: i32) -> (i32, i32) {
    %c0_i32 = arith.constant 0 : i32
    %c0_i32_0 = arith.constant 0 : i32
    %c0_i32_1 = arith.constant 0 : i32
    return %c0_i32, %c0_i32_0 : i32, i32
  }
  func.func @transform_5(%arg0: i32) -> (i32, i32) {
    %c0_i32 = arith.constant 0 : i32
    %c0_i32_0 = arith.constant 0 : i32
    %c0_i32_1 = arith.constant 0 : i32
    return %c0_i32, %c0_i32_0 : i32, i32
  }
  func.func @transform_6(%arg0: i32) -> (i32, i32) {
    %c0_i32 = arith.constant 0 : i32
    %c0_i32_0 = arith.constant 0 : i32
    return %arg0, %c0_i32 : i32, i32
  }
}

</mosaic_0001>

<llo_original>
// kernel: tpu_custom_call.1
$region0: #{tpu_custom_call.1}
  #allocation0 [shape = 'u32[]', space=smem, size = 0x4, offset = 0x4, fixed_abs, tag = 'smem constant byte address 0x4 - core index']
  #allocation1 [shape = 'u32[144,128]{1,0:T(1,128)}', space=vmem, size = 0x12000, scoped, tag = 'internal scratch']
  %s0 = inlined_call_operand.vmem [shape: f32[16,8], index: 0, kind: input, shape index: {}]
  %s1 = inlined_call_operand.vmem [shape: f32[8,24], index: 1, kind: input, shape index: {}]
  %s2 = inlined_call_operand.vmem [shape: f32[8,8], index: 2, kind: input, shape index: {}]
  %s3 = inlined_call_operand.vmem [shape: f32[8,16], index: 3, kind: input, shape index: {}]
  %s4 = inlined_call_operand.vmem [shape: f32[16,8], index: 4, kind: input, shape index: {}]
  %s5 = inlined_call_operand.vmem [shape: f32[8,24], index: 5, kind: input, shape index: {}]
  %s6 = inlined_call_operand.vmem [shape: f32[16,8], index: 6, kind: output, shape index: {}]
  %s7 = sld [smem:[#allocation0]]
  $region57: #{tpu_custom_call.1} parent=0
    _
  %s9 = ssub.s32 1, %s7
  %s10 = scalar_select 0, %s9, %s7
  loop: start=0, step=1, limit=4
  $region2: #{tpu_custom_call.1} parent=0 // loop_pre_header
    _
  $region3: #{tpu_custom_call.1} parent=0 // loop_header
    %s12 = sphi 0, %s16
    %p13 = scmp.ge.s32.totalorder %s12, 4
    %s22 = sphi 0, %s24
    %s25 = sphi 0, %s22
    %s26 = sphi 0, %s25
    %s42 = sphi 0, %s26
    %s46 = sphi 0, %s46
    %s48 = sphi 0, %s46
    %s49 = sphi 0, %s48
    %s63 = sphi 0, %s49
    %s67 = sphi 0, %s67
    %s69 = sphi 0, %s67
    %s70 = sphi 0, %s69
    %s84 = sphi 0, %s70
    %s88 = sphi 0, %s88
    %s90 = sphi 0, %s88
    %s91 = sphi 0, %s90
    %s105 = sphi 0, %s91
    %s109 = sphi 0, %s109
    %s111 = sphi 0, %s109
    %s112 = sphi 0, %s111
    %s126 = sphi 0, %s112
    %s130 = sphi 0, %s130
    %s132 = sphi 0, %s130
    %s133 = sphi 0, %s132
    %s147 = sphi 0, %s133
    %s153 = sphi 0, %s155
    %s156 = sphi 0, %s153
    %s157 = sphi 0, %s156
    %s173 = sphi 0, %s157
  $region4: #{tpu_custom_call.1} parent=0 // loop_header_branch
    %15 = sbr.rel (%p13) target = $region8
  $region5: #{tpu_custom_call.1} parent=0 // loop_body
    %s17 = ssub.s32 %s12, 1
    %s18 = ssub.s32 %s12, 2
    %s19 = sadd.s32 %s12, 1
    %s20 = ssub.s32 %s12, %s19
    %p21 = scmp.eq.s32.totalorder %s20, 0
    %s23 = sadd.s32 %s22, 1
    %s24 = scalar_select %p21, %s22, %s23
    %p27 = pneg %p21
    %p28 = scmp.eq.s32.totalorder %s12, 1
    %p29 = por %p27, %p28
    %p30 = scmp.ne.s32.totalorder %s22, %s25
    %p31 = scmp.eq.s32.totalorder %s12, 0
    %p32 = por %p30, %p31
    %p33 = scmp.ne.s32.totalorder %s22, %s25
    %p34 = scmp.eq.s32.totalorder %s17, 1
    %p35 = por %p33, %p34
    %p36 = scmp.ne.s32.totalorder %s25, %s26
    %p37 = scmp.eq.s32.totalorder %s17, 0
    %p38 = por %p36, %p37
    %p39 = scmp.ne.s32.totalorder %s25, %s26
    %p40 = scmp.eq.s32.totalorder %s18, 1
    %p41 = por %p39, %p40
    %p43 = scmp.ne.s32.totalorder %s26, %s42
    %p44 = scmp.eq.s32.totalorder %s18, 0
    %p45 = por %p43, %p44
    %s47 = sadd.s32 %s46, 1
    %p50 = scmp.eq.s32.totalorder %s12, 1
    %p51 = scmp.ne.s32.totalorder %s46, %s48
    %p52 = scmp.eq.s32.totalorder %s12, 0
    %p53 = por %p51, %p52
    %p54 = scmp.ne.s32.totalorder %s46, %s48
    %p55 = scmp.eq.s32.totalorder %s17, 1
    %p56 = por %p54, %p55
    %p57 = scmp.ne.s32.totalorder %s48, %s49
    %p58 = scmp.eq.s32.totalorder %s17, 0
    %p59 = por %p57, %p58
    %p60 = scmp.ne.s32.totalorder %s48, %s49
    %p61 = scmp.eq.s32.totalorder %s18, 1
    %p62 = por %p60, %p61
    %p64 = scmp.ne.s32.totalorder %s49, %s63
    %p65 = scmp.eq.s32.totalorder %s18, 0
    %p66 = por %p64, %p65
    %s68 = sadd.s32 %s67, 1
    %p71 = scmp.eq.s32.totalorder %s12, 1
    %p72 = scmp.ne.s32.totalorder %s67, %s69
    %p73 = scmp.eq.s32.totalorder %s12, 0
    %p74 = por %p72, %p73
    %p75 = scmp.ne.s32.totalorder %s67, %s69
    %p76 = scmp.eq.s32.totalorder %s17, 1
    %p77 = por %p75, %p76
    %p78 = scmp.ne.s32.totalorder %s69, %s70
    %p79 = scmp.eq.s32.totalorder %s17, 0
    %p80 = por %p78, %p79
    %p81 = scmp.ne.s32.totalorder %s69, %s70
    %p82 = scmp.eq.s32.totalorder %s18, 1
    %p83 = por %p81, %p82
    %p85 = scmp.ne.s32.totalorder %s70, %s84
    %p86 = scmp.eq.s32.totalorder %s18, 0
    %p87 = por %p85, %p86
    %s89 = sadd.s32 %s88, 1
    %p92 = scmp.eq.s32.totalorder %s12, 1
    %p93 = scmp.ne.s32.totalorder %s88, %s90
    %p94 = scmp.eq.s32.totalorder %s12, 0
    %p95 = por %p93, %p94
    %p96 = scmp.ne.s32.totalorder %s88, %s90
    %p97 = scmp.eq.s32.totalorder %s17, 1
    %p98 = por %p96, %p97
    %p99 = scmp.ne.s32.totalorder %s90, %s91
    %p100 = scmp.eq.s32.totalorder %s17, 0
    %p101 = por %p99, %p100
    %p102 = scmp.ne.s32.totalorder %s90, %s91
    %p103 = scmp.eq.s32.totalorder %s18, 1
    %p104 = por %p102, %p103
    %p106 = scmp.ne.s32.totalorder %s91, %s105
    %p107 = scmp.eq.s32.totalorder %s18, 0
    %p108 = por %p106, %p107
    %s110 = sadd.s32 %s109, 1
    %p113 = scmp.eq.s32.totalorder %s12, 1
    %p114 = scmp.ne.s32.totalorder %s109, %s111
    %p115 = scmp.eq.s32.totalorder %s12, 0
    %p116 = por %p114, %p115
    %p117 = scmp.ne.s32.totalorder %s109, %s111
    %p118 = scmp.eq.s32.totalorder %s17, 1
    %p119 = por %p117, %p118
    %p120 = scmp.ne.s32.totalorder %s111, %s112
    %p121 = scmp.eq.s32.totalorder %s17, 0
    %p122 = por %p120, %p121
    %p123 = scmp.ne.s32.totalorder %s111, %s112
    %p124 = scmp.eq.s32.totalorder %s18, 1
    %p125 = por %p123, %p124
    %p127 = scmp.ne.s32.totalorder %s112, %s126
    %p128 = scmp.eq.s32.totalorder %s18, 0
    %p129 = por %p127, %p128
    %s131 = sadd.s32 %s130, 1
    %p134 = scmp.eq.s32.totalorder %s12, 1
    %p135 = scmp.ne.s32.totalorder %s130, %s132
    %p136 = scmp.eq.s32.totalorder %s12, 0
    %p137 = por %p135, %p136
    %p138 = scmp.ne.s32.totalorder %s130, %s132
    %p139 = scmp.eq.s32.totalorder %s17, 1
    %p140 = por %p138, %p139
    %p141 = scmp.ne.s32.totalorder %s132, %s133
    %p142 = scmp.eq.s32.totalorder %s17, 0
    %p143 = por %p141, %p142
    %p144 = scmp.ne.s32.totalorder %s132, %s133
    %p145 = scmp.eq.s32.totalorder %s18, 1
    %p146 = por %p144, %p145
    %p148 = scmp.ne.s32.totalorder %s133, %s147
    %p149 = scmp.eq.s32.totalorder %s18, 0
    %p150 = por %p148, %p149
    %s151 = ssub.s32 %s12, %s19
    %p152 = scmp.eq.s32.totalorder %s151, 0
    %s154 = sadd.s32 %s153, 1
    %s155 = scalar_select %p152, %s153, %s154
    %p158 = pneg %p152
    %p159 = scmp.eq.s32.totalorder %s12, 1
    %p160 = por %p158, %p159
    %p161 = scmp.ne.s32.totalorder %s153, %s156
    %p162 = scmp.eq.s32.totalorder %s12, 0
    %p163 = por %p161, %p162
    %p164 = scmp.ne.s32.totalorder %s153, %s156
    %p165 = scmp.eq.s32.totalorder %s17, 1
    %p166 = por %p164, %p165
    %p167 = scmp.ne.s32.totalorder %s156, %s157
    %p168 = scmp.eq.s32.totalorder %s17, 0
    %p169 = por %p167, %p168
    %p170 = scmp.ne.s32.totalorder %s156, %s157
    %p171 = scmp.eq.s32.totalorder %s18, 1
    %p172 = por %p170, %p171
    %p174 = scmp.ne.s32.totalorder %s157, %s173
    %p175 = scmp.eq.s32.totalorder %s18, 0
    %p176 = por %p174, %p175
    %p177 = scmp.le.s32.totalorder 1, %s12
    %p178 = scmp.lt.s32.totalorder %s12, 3
    %p179 = pnand %p177, %p178
    %p180 = pneg %p179
    // Predicated region
    $region9: #{tpu_custom_call.1} parent=5 // pred_check
      _
    $region10: #{tpu_custom_call.1} parent=5 // pred_check_branch
      %182 = sbr.rel (%p179) target = $region12
    $region11: #{tpu_custom_call.1} parent=5 // pred_region
      %s183 = ssub.s32 %s12, 1
      // Predicated region
      $region13: #{tpu_custom_call.1} parent=11 // pred_check
        %p184 = pneg %p59
      $region14: #{tpu_custom_call.1} parent=11 // pred_check_branch
        %186 = sbr.rel (%p184) target = $region16
      $region15: #{tpu_custom_call.1} parent=11 // pred_region
        _
      $region16: #{tpu_custom_call.1} parent=11 // pred_fallthru
        _
      // Predicated region
      $region17: #{tpu_custom_call.1} parent=11 // pred_check
        %p187 = pneg %p80
      $region18: #{tpu_custom_call.1} parent=11 // pred_check_branch
        %189 = sbr.rel (%p187) target = $region20
      $region19: #{tpu_custom_call.1} parent=11 // pred_region
        _
      $region20: #{tpu_custom_call.1} parent=11 // pred_fallthru
        _
      // Predicated region
      $region21: #{tpu_custom_call.1} parent=11 // pred_check
        %p190 = pneg %p101
      $region22: #{tpu_custom_call.1} parent=11 // pred_check_branch
        %192 = sbr.rel (%p190) target = $region24
      $region23: #{tpu_custom_call.1} parent=11 // pred_region
        _
      $region24: #{tpu_custom_call.1} parent=11 // pred_fallthru
        _
      // Predicated region
      $region25: #{tpu_custom_call.1} parent=11 // pred_check
        %p193 = pneg %p122
      $region26: #{tpu_custom_call.1} parent=11 // pred_check_branch
        %195 = sbr.rel (%p193) target = $region28
      $region27: #{tpu_custom_call.1} parent=11 // pred_region
        _
      $region28: #{tpu_custom_call.1} parent=11 // pred_fallthru
        _
      // Predicated region
      $region29: #{tpu_custom_call.1} parent=11 // pred_check
        %p196 = pneg %p143
      $region30: #{tpu_custom_call.1} parent=11 // pred_check_branch
        %198 = sbr.rel (%p196) target = $region32
      $region31: #{tpu_custom_call.1} parent=11 // pred_region
        _
      $region32: #{tpu_custom_call.1} parent=11 // pred_fallthru
        _
    $region12: #{tpu_custom_call.1} parent=5 // pred_fallthru
      _
    %p199 = scmp.lt.s32.totalorder %s12, 2
    // Predicated region
    $region33: #{tpu_custom_call.1} parent=5 // pred_check
      %p200 = pneg %p199
    $region34: #{tpu_custom_call.1} parent=5 // pred_check_branch
      %202 = sbr.rel (%p200) target = $region36
    $region35: #{tpu_custom_call.1} parent=5 // pred_region
      // Predicated region
      $region37: #{tpu_custom_call.1} parent=35 // pred_check
        %p203 = pneg %p32
      $region38: #{tpu_custom_call.1} parent=35 // pred_check_branch
        %205 = sbr.rel (%p203) target = $region40
      $region39: #{tpu_custom_call.1} parent=35 // pred_region
        %p206 = scmp.lt.s32.totalorder %s12, 1
        %s207 = scalar_select %p206, %s12, 1
        %s208 = smul.addr %s207, 8
        %s209 = scalar_lea.vmem %s0, %s208
      $region40: #{tpu_custom_call.1} parent=35 // pred_fallthru
        _
    $region36: #{tpu_custom_call.1} parent=5 // pred_fallthru
      _
    %p210 = scmp.le.s32.totalorder 1, %s12
    %p211 = scmp.lt.s32.totalorder %s12, 3
    %p212 = pnand %p210, %p211
    %p213 = pneg %p212
    // Predicated region
    $region41: #{tpu_custom_call.1} parent=5 // pred_check
      _
    $region42: #{tpu_custom_call.1} parent=5 // pred_check_branch
      %215 = sbr.rel (%p212) target = $region44
    $region43: #{tpu_custom_call.1} parent=5 // pred_region
      %s216 = ssub.s32 %s12, 1
      %p217 = scmp.lt.s32.totalorder %s17, 1
      %s218 = scalar_select %p217, %s17, 1
      %s219 = smul.addr %s218, 8
      %s220 = scalar_lea.vmem %s0, %s219
      %p221 = pneg %p38
      %p222 = pneg %p35
      %p223 = pneg %p59
      %p224 = pneg %p56
      %p225 = pneg %p80
      %p226 = pneg %p77
      %p227 = pneg %p101
      %p228 = pneg %p98
      %p229 = pneg %p122
      %p230 = pneg %p119
      %p231 = pneg %p143
      %p232 = pneg %p140
      %p233 = pneg %p169
      %p234 = pneg %p166
      %p235 = scmp.lt.s32.totalorder %s17, 1
      %s236 = scalar_select %p235, %s17, 1
      %s237 = smul.addr %s236, 8
      %s238 = scalar_lea.vmem %s6, %s237
      %p239 = scmp.lt.s32.totalorder %s17, 1
      %s240 = scalar_select %p239, %s17, 1
      %s241 = smul.addr %s240, 8
      %s242 = scalar_lea.vmem %s0, %s241
      %p243 = scmp.lt.s32.totalorder %s17, 1
      %s244 = scalar_select %p243, %s17, 1
      %s245 = smul.addr %s244, 8
      %s246 = scalar_lea.vmem %s6, %s245
      %v247 = vld [vmem:[%s242] sm:$0xff]
      %v248 = vld [vmem:[%s1] sm:$0xff]
      %v249 = vld [vmem:[%s5] sm:$0x1]
      %v250 = vlaneseq
      %v251 = vshrl.u32 %v250, 7
      %v252 = vsub.s32 0, %v251
      %v253 = vrot.slane %v249, %v252
      %vm254 = vcmask 64512
      %v256 = vsel %vm254, %v247, 0
      %258 = vmatprep.subr.mxu0 0.0
      %259 = vmatpush1.msra.mxu0 %v248
      %260 = vmatprep.subr.mxu0 0.0
      %261 = vmatpush1.msra.mxu0 0.0
      %262 = vmatprep.subr.mxu0 0.0
      %263 = vmatpush1.msra.mxu0 0.0
      %264 = vmatprep.subr.mxu0 0.0
      %265 = vmatpush1.msra.mxu0 0.0
      %266 = vmatprep.subr.mxu0 0.0
      %267 = vmatpush1.msra.mxu0 0.0
      %268 = vmatprep.subr.mxu0 0.0
      %269 = vmatpush1.msra.mxu0 0.0
      %270 = vmatprep.subr.mxu0 0.0
      %271 = vmatpush1.msra.mxu0 0.0
      %272 = vmatprep.subr.mxu0 0.0
      %273 = vmatpush1.msra.mxu0 0.0
      %274 = vmatprep.subr.mxu0 0.0
      %275 = vmatpush1.msra.mxu0 0.0
      %276 = vmatprep.subr.mxu0 0.0
      %277 = vmatpush1.msra.mxu0 0.0
      %278 = vmatprep.subr.mxu0 0.0
      %279 = vmatpush1.msra.mxu0 0.0
      %280 = vmatprep.subr.mxu0 0.0
      %281 = vmatpush1.msra.mxu0 0.0
      %282 = vmatprep.subr.mxu0 0.0
      %283 = vmatpush1.msra.mxu0 0.0
      %284 = vmatprep.subr.mxu0 0.0
      %285 = vmatpush1.msra.mxu0 0.0
      %286 = vmatprep.subr.mxu0 0.0
      %287 = vmatpush1.msra.mxu0 0.0
      %288 = vmatprep.subr.mxu0 0.0
      %289 = vmatpush1.msra.mxu0 0.0
      %290 = vmatprep.subr.mxu0 0.0
      %291 = vmatpush1.msra.mxu0 0.0
      %292 = vmatprep.subr.mxu0 0.0
      %293 = vmatpush1.msra.mxu0 0.0
      %294 = vmatprep.subr.mxu0 0.0
      %295 = vmatpush1.msra.mxu0 0.0
      %296 = vmatprep.subr.mxu0 0.0
      %297 = vmatpush1.msra.mxu0 0.0
      %298 = vmatprep.subr.mxu0 0.0
      %299 = vmatpush1.msra.mxu0 0.0
      %300 = vmatprep.subr.mxu0 0.0
      %301 = vmatpush1.msra.mxu0 0.0
      %302 = vmatprep.subr.mxu0 0.0
      %303 = vmatpush1.msra.mxu0 0.0
      %304 = vmatprep.subr.mxu0 0.0
      %305 = vmatpush1.msra.mxu0 0.0
      %306 = vmatprep.subr.mxu0 0.0
      %307 = vmatpush1.msra.mxu0 0.0
      %308 = vmatprep.subr.mxu0 0.0
      %309 = vmatpush1.msra.mxu0 0.0
      %310 = vmatprep.subr.mxu0 0.0
      %311 = vmatpush1.msra.mxu0 0.0
      %312 = vmatprep.subr.mxu0 0.0
      %313 = vmatpush1.msra.mxu0 0.0
      %314 = vmatprep.subr.mxu0 0.0
      %315 = vmatpush1.msra.mxu0 0.0
      %316 = vmatprep.subr.mxu0 0.0
      %317 = vmatpush1.msra.mxu0 0.0
      %318 = vmatprep.subr.mxu0 0.0
      %319 = vmatpush1.msra.mxu0 0.0
      %320 = vmatprep.subr.mxu0 0.0
      %321 = vmatpush1.msra.mxu0 0.0
      %322 = vmatprep.mubr.f32.mxu0 0.0
      %323 = vmatmul.mubr.f32.gmra.mrb[0].mxu0 %v256
      %v324 = vpop.f32.mrb[0].mxu0
      %v325 = vadd.f32 %v253, %v324
      %v326 = vpop.f32.mrb[0].mxu0
      %327 = vdwg.mxu0
      %329 = vrot.lane.b32.xlu0 %v325, 124
      %v330 = vpop.permute.xlu0 %329
      %v332 = vcombine.high %v325, 0.0
      %v334 = vunpack.c.l.s4 1983009808
      %v335 = vunpack.c.0.s8 %v334
      %v336 = vlaneseq
      %v337 = vshrl.u32 %v336, 7
      %v338 = vsub.s32 %v335, %v337
      %v339 = vrot.slane %v325, %v338
      %v341 = vunpack.c.l.s4 1983009808
      %v342 = vunpack.c.0.s8 %v341
      %v343 = vlaneseq
      %v344 = vshrl.u32 %v343, 7
      %v345 = vsub.s32 %v342, %v344
      %v346 = vrot.slane %v332, %v345
      %v347 = vcombine.high %v330, 0.0
      %v349 = vunpack.c.l.s4 1983009808
      %v350 = vunpack.c.0.s8 %v349
      %v351 = vlaneseq
      %v352 = vshrl.u32 %v351, 7
      %v353 = vsub.s32 %v350, %v352
      %v354 = vrot.slane %v330, %v353
      %v356 = vunpack.c.l.s4 1983009808
      %v357 = vunpack.c.0.s8 %v356
      %v358 = vlaneseq
      %v359 = vshrl.u32 %v358, 7
      %v360 = vsub.s32 %v357, %v359
      %v361 = vrot.slane %v347, %v360
      %v362 = vcombine.low %v339, %v354
      %v363 = vcombine.high %v339, %v354
      %v365 = vunpack.c.l.s4 1934713408
      %v366 = vunpack.c.0.s8 %v365
      %v367 = vlaneseq
      %v368 = vshrl.u32 %v367, 7
      %v369 = vsub.s32 %v366, %v368
      %v370 = vrot.slane %v362, %v369
      %v372 = vunpack.c.l.s4 1934713408
      %v373 = vunpack.c.0.s8 %v372
      %v374 = vlaneseq
      %v375 = vshrl.u32 %v374, 7
      %v376 = vsub.s32 %v373, %v375
      %v377 = vrot.slane %v363, %v376
      %v378 = vcombine.low %v346, %v361
      %v379 = vcombine.high %v346, %v361
      %v381 = vunpack.c.l.s4 1934713408
      %v382 = vunpack.c.0.s8 %v381
      %v383 = vlaneseq
      %v384 = vshrl.u32 %v383, 7
      %v385 = vsub.s32 %v382, %v384
      %v386 = vrot.slane %v378, %v385
      %v388 = vunpack.c.l.s4 1934713408
      %v389 = vunpack.c.0.s8 %v388
      %v390 = vlaneseq
      %v391 = vshrl.u32 %v390, 7
      %v392 = vsub.s32 %v389, %v391
      %v393 = vrot.slane %v379, %v392
      %v394 = vcombine.high %v370, 0.0
      %v395 = vcombine.high %v377, 0.0
      %v396 = vcombine.high %v386, 0.0
      %v397 = vcombine.high %v393, 0.0
      %v398 = vcombine.low %v370, %v377
      %v400 = vunpack.c.l.s4 1983009808
      %v401 = vunpack.c.0.s8 %v400
      %v402 = vlaneseq
      %v403 = vshrl.u32 %v402, 7
      %v404 = vsub.s32 %v401, %v403
      %v405 = vrot.slane %v398, %v404
      %v406 = vcombine.low %v394, %v395
      %v408 = vunpack.c.l.s4 1983009808
      %v409 = vunpack.c.0.s8 %v408
      %v410 = vlaneseq
      %v411 = vshrl.u32 %v410, 7
      %v412 = vsub.s32 %v409, %v411
      %v413 = vrot.slane %v406, %v412
      %v414 = vcombine.low %v386, %v393
      %v416 = vunpack.c.l.s4 1983009808
      %v417 = vunpack.c.0.s8 %v416
      %v418 = vlaneseq
      %v419 = vshrl.u32 %v418, 7
      %v420 = vsub.s32 %v417, %v419
      %v421 = vrot.slane %v414, %v420
      %v422 = vcombine.low %v396, %v397
      %v424 = vunpack.c.l.s4 1983009808
      %v425 = vunpack.c.0.s8 %v424
      %v426 = vlaneseq
      %v427 = vshrl.u32 %v426, 7
      %v428 = vsub.s32 %v425, %v427
      %v429 = vrot.slane %v422, %v428
      %v430 = vcombine.low %v405, %v413
      %v432 = vunpack.c.l.s4 1934713408
      %v433 = vunpack.c.0.s8 %v432
      %v434 = vlaneseq
      %v435 = vshrl.u32 %v434, 7
      %v436 = vsub.s32 %v433, %v435
      %v437 = vrot.slane %v430, %v436
      %v438 = vcombine.low %v421, %v429
      %v440 = vunpack.c.l.s4 1934713408
      %v441 = vunpack.c.0.s8 %v440
      %v442 = vlaneseq
      %v443 = vshrl.u32 %v442, 7
      %v444 = vsub.s32 %v441, %v443
      %v445 = vrot.slane %v438, %v444
      %v446 = vcombine.low %v437, %v445
      %v447 = vcombine.high %v437, %v445
      %448 = vrot.lane.b32.xlu0 %v325, 120
      %v449 = vpop.permute.xlu0 %448
      %450 = vrot.lane.b32.xlu0 %v330, 120
      %v451 = vpop.permute.xlu0 %450
      %v454 = vcombine.high %v449, 0.0
      %v456 = vunpack.c.l.s4 1983009808
      %v457 = vunpack.c.0.s8 %v456
      %v458 = vlaneseq
      %v459 = vshrl.u32 %v458, 7
      %v460 = vsub.s32 %v457, %v459
      %v461 = vrot.slane %v449, %v460
      %v463 = vunpack.c.l.s4 1983009808
      %v464 = vunpack.c.0.s8 %v463
      %v465 = vlaneseq
      %v466 = vshrl.u32 %v465, 7
      %v467 = vsub.s32 %v464, %v466
      %v468 = vrot.slane %v454, %v467
      %v469 = vcombine.high %v451, 0.0
      %v471 = vunpack.c.l.s4 1983009808
      %v472 = vunpack.c.0.s8 %v471
      %v473 = vlaneseq
      %v474 = vshrl.u32 %v473, 7
      %v475 = vsub.s32 %v472, %v474
      %v476 = vrot.slane %v451, %v475
      %v478 = vunpack.c.l.s4 1983009808
      %v479 = vunpack.c.0.s8 %v478
      %v480 = vlaneseq
      %v481 = vshrl.u32 %v480, 7
      %v482 = vsub.s32 %v479, %v481
      %v483 = vrot.slane %v469, %v482
      %v484 = vcombine.low %v461, %v476
      %v485 = vcombine.high %v461, %v476
      %v487 = vunpack.c.l.s4 1934713408
      %v488 = vunpack.c.0.s8 %v487
      %v489 = vlaneseq
      %v490 = vshrl.u32 %v489, 7
      %v491 = vsub.s32 %v488, %v490
      %v492 = vrot.slane %v484, %v491
      %v494 = vunpack.c.l.s4 1934713408
      %v495 = vunpack.c.0.s8 %v494
      %v496 = vlaneseq
      %v497 = vshrl.u32 %v496, 7
      %v498 = vsub.s32 %v495, %v497
      %v499 = vrot.slane %v485, %v498
      %v500 = vcombine.low %v468, %v483
      %v501 = vcombine.high %v468, %v483
      %v503 = vunpack.c.l.s4 1934713408
      %v504 = vunpack.c.0.s8 %v503
      %v505 = vlaneseq
      %v506 = vshrl.u32 %v505, 7
      %v507 = vsub.s32 %v504, %v506
      %v508 = vrot.slane %v500, %v507
      %v510 = vunpack.c.l.s4 1934713408
      %v511 = vunpack.c.0.s8 %v510
      %v512 = vlaneseq
      %v513 = vshrl.u32 %v512, 7
      %v514 = vsub.s32 %v511, %v513
      %v515 = vrot.slane %v501, %v514
      %v516 = vcombine.high %v492, 0.0
      %v517 = vcombine.high %v499, 0.0
      %v518 = vcombine.high %v508, 0.0
      %v519 = vcombine.high %v515, 0.0
      %v520 = vcombine.low %v492, %v499
      %v522 = vunpack.c.l.s4 1983009808
      %v523 = vunpack.c.0.s8 %v522
      %v524 = vlaneseq
      %v525 = vshrl.u32 %v524, 7
      %v526 = vsub.s32 %v523, %v525
      %v527 = vrot.slane %v520, %v526
      %v528 = vcombine.low %v516, %v517
      %v530 = vunpack.c.l.s4 1983009808
      %v531 = vunpack.c.0.s8 %v530
      %v532 = vlaneseq
      %v533 = vshrl.u32 %v532, 7
      %v534 = vsub.s32 %v531, %v533
      %v535 = vrot.slane %v528, %v534
      %v536 = vcombine.low %v508, %v515
      %v538 = vunpack.c.l.s4 1983009808
      %v539 = vunpack.c.0.s8 %v538
      %v540 = vlaneseq
      %v541 = vshrl.u32 %v540, 7
      %v542 = vsub.s32 %v539, %v541
      %v543 = vrot.slane %v536, %v542
      %v544 = vcombine.low %v518, %v519
      %v546 = vunpack.c.l.s4 1983009808
      %v547 = vunpack.c.0.s8 %v546
      %v548 = vlaneseq
      %v549 = vshrl.u32 %v548, 7
      %v550 = vsub.s32 %v547, %v549
      %v551 = vrot.slane %v544, %v550
      %v552 = vcombine.low %v527, %v535
      %v554 = vunpack.c.l.s4 1934713408
      %v555 = vunpack.c.0.s8 %v554
      %v556 = vlaneseq
      %v557 = vshrl.u32 %v556, 7
      %v558 = vsub.s32 %v555, %v557
      %v559 = vrot.slane %v552, %v558
      %v560 = vcombine.low %v543, %v551
      %v562 = vunpack.c.l.s4 1934713408
      %v563 = vunpack.c.0.s8 %v562
      %v564 = vlaneseq
      %v565 = vshrl.u32 %v564, 7
      %v566 = vsub.s32 %v563, %v565
      %v567 = vrot.slane %v560, %v566
      %v568 = vcombine.low %v559, %v567
      %v569 = vcombine.high %v559, %v567
      %570 = vrot.lane.b32.xlu0 %v325, 112
      %v571 = vpop.permute.xlu0 %570
      %572 = vrot.lane.b32.xlu0 %v330, 112
      %v573 = vpop.permute.xlu0 %572
      %v576 = vcombine.high %v571, 0.0
      %v578 = vunpack.c.l.s4 1983009808
      %v579 = vunpack.c.0.s8 %v578
      %v580 = vlaneseq
      %v581 = vshrl.u32 %v580, 7
      %v582 = vsub.s32 %v579, %v581
      %v583 = vrot.slane %v571, %v582
      %v585 = vunpack.c.l.s4 1983009808
      %v586 = vunpack.c.0.s8 %v585
      %v587 = vlaneseq
      %v588 = vshrl.u32 %v587, 7
      %v589 = vsub.s32 %v586, %v588
      %v590 = vrot.slane %v576, %v589
      %v591 = vcombine.high %v573, 0.0
      %v593 = vunpack.c.l.s4 1983009808
      %v594 = vunpack.c.0.s8 %v593
      %v595 = vlaneseq
      %v596 = vshrl.u32 %v595, 7
      %v597 = vsub.s32 %v594, %v596
      %v598 = vrot.slane %v573, %v597
      %v600 = vunpack.c.l.s4 1983009808
      %v601 = vunpack.c.0.s8 %v600
      %v602 = vlaneseq
      %v603 = vshrl.u32 %v602, 7
      %v604 = vsub.s32 %v601, %v603
      %v605 = vrot.slane %v591, %v604
      %v606 = vcombine.low %v583, %v598
      %v607 = vcombine.high %v583, %v598
      %v609 = vunpack.c.l.s4 1934713408
      %v610 = vunpack.c.0.s8 %v609
      %v611 = vlaneseq
      %v612 = vshrl.u32 %v611, 7
      %v613 = vsub.s32 %v610, %v612
      %v614 = vrot.slane %v606, %v613
      %v616 = vunpack.c.l.s4 1934713408
      %v617 = vunpack.c.0.s8 %v616
      %v618 = vlaneseq
      %v619 = vshrl.u32 %v618, 7
      %v620 = vsub.s32 %v617, %v619
      %v621 = vrot.slane %v607, %v620
      %v622 = vcombine.low %v590, %v605
      %v623 = vcombine.high %v590, %v605
      %v625 = vunpack.c.l.s4 1934713408
      %v626 = vunpack.c.0.s8 %v625
      %v627 = vlaneseq
      %v628 = vshrl.u32 %v627, 7
      %v629 = vsub.s32 %v626, %v628
      %v630 = vrot.slane %v622, %v629
      %v632 = vunpack.c.l.s4 1934713408
      %v633 = vunpack.c.0.s8 %v632
      %v634 = vlaneseq
      %v635 = vshrl.u32 %v634, 7
      %v636 = vsub.s32 %v633, %v635
      %v637 = vrot.slane %v623, %v636
      %v638 = vcombine.high %v614, 0.0
      %v639 = vcombine.high %v621, 0.0
      %v640 = vcombine.high %v630, 0.0
      %v641 = vcombine.high %v637, 0.0
      %v642 = vcombine.low %v614, %v621
      %v644 = vunpack.c.l.s4 1983009808
      %v645 = vunpack.c.0.s8 %v644
      %v646 = vlaneseq
      %v647 = vshrl.u32 %v646, 7
      %v648 = vsub.s32 %v645, %v647
      %v649 = vrot.slane %v642, %v648
      %v650 = vcombine.low %v638, %v639
      %v652 = vunpack.c.l.s4 1983009808
      %v653 = vunpack.c.0.s8 %v652
      %v654 = vlaneseq
      %v655 = vshrl.u32 %v654, 7
      %v656 = vsub.s32 %v653, %v655
      %v657 = vrot.slane %v650, %v656
      %v658 = vcombine.low %v630, %v637
      %v660 = vunpack.c.l.s4 1983009808
      %v661 = vunpack.c.0.s8 %v660
      %v662 = vlaneseq
      %v663 = vshrl.u32 %v662, 7
      %v664 = vsub.s32 %v661, %v663
      %v665 = vrot.slane %v658, %v664
      %v666 = vcombine.low %v640, %v641
      %v668 = vunpack.c.l.s4 1983009808
      %v669 = vunpack.c.0.s8 %v668
      %v670 = vlaneseq
      %v671 = vshrl.u32 %v670, 7
      %v672 = vsub.s32 %v669, %v671
      %v673 = vrot.slane %v666, %v672
      %v674 = vcombine.low %v649, %v657
      %v676 = vunpack.c.l.s4 1934713408
      %v677 = vunpack.c.0.s8 %v676
      %v678 = vlaneseq
      %v679 = vshrl.u32 %v678, 7
      %v680 = vsub.s32 %v677, %v679
      %v681 = vrot.slane %v674, %v680
      %v682 = vcombine.low %v665, %v673
      %v684 = vunpack.c.l.s4 1934713408
      %v685 = vunpack.c.0.s8 %v684
      %v686 = vlaneseq
      %v687 = vshrl.u32 %v686, 7
      %v688 = vsub.s32 %v685, %v687
      %v689 = vrot.slane %v682, %v688
      %v690 = vcombine.low %v681, %v689
      %v691 = vcombine.high %v681, %v689
      %vm692 = vcmask 31744
      %v694 = vsel %vm692, %v446, 0
      %v697 = vsel %vm692, %v568, 0
      %699 = vmatprep.subr.mxu0 0.0
      %700 = vmatpush1.xpose.msra.mxu0 %v697
      %701 = vmatprep.subr.mxu0 0.0
      %702 = vmatpush1.xpose.msra.mxu0 0.0
      %703 = vmatprep.subr.mxu0 0.0
      %704 = vmatpush1.xpose.msra.mxu0 0.0
      %705 = vmatprep.subr.mxu0 0.0
      %706 = vmatpush1.xpose.msra.mxu0 0.0
      %707 = vmatprep.subr.mxu0 0.0
      %708 = vmatpush1.xpose.msra.mxu0 0.0
      %709 = vmatprep.subr.mxu0 0.0
      %710 = vmatpush1.xpose.msra.mxu0 0.0
      %711 = vmatprep.subr.mxu0 0.0
      %712 = vmatpush1.xpose.msra.mxu0 0.0
      %713 = vmatprep.subr.mxu0 0.0
      %714 = vmatpush1.xpose.msra.mxu0 0.0
      %715 = vmatprep.subr.mxu0 0.0
      %716 = vmatpush1.xpose.msra.mxu0 0.0
      %717 = vmatprep.subr.mxu0 0.0
      %718 = vmatpush1.xpose.msra.mxu0 0.0
      %719 = vmatprep.subr.mxu0 0.0
      %720 = vmatpush1.xpose.msra.mxu0 0.0
      %721 = vmatprep.subr.mxu0 0.0
      %722 = vmatpush1.xpose.msra.mxu0 0.0
      %723 = vmatprep.subr.mxu0 0.0
      %724 = vmatpush1.xpose.msra.mxu0 0.0
      %725 = vmatprep.subr.mxu0 0.0
      %726 = vmatpush1.xpose.msra.mxu0 0.0
      %727 = vmatprep.subr.mxu0 0.0
      %728 = vmatpush1.xpose.msra.mxu0 0.0
      %729 = vmatprep.subr.mxu0 0.0
      %730 = vmatpush1.xpose.msra.mxu0 0.0
      %731 = vmatprep.subr.mxu0 0.0
      %732 = vmatpush1.xpose.msra.mxu0 0.0
      %733 = vmatprep.subr.mxu0 0.0
      %734 = vmatpush1.xpose.msra.mxu0 0.0
      %735 = vmatprep.subr.mxu0 0.0
      %736 = vmatpush1.xpose.msra.mxu0 0.0
      %737 = vmatprep.subr.mxu0 0.0
      %738 = vmatpush1.xpose.msra.mxu0 0.0
      %739 = vmatprep.subr.mxu0 0.0
      %740 = vmatpush1.xpose.msra.mxu0 0.0
      %741 = vmatprep.subr.mxu0 0.0
      %742 = vmatpush1.xpose.msra.mxu0 0.0
      %743 = vmatprep.subr.mxu0 0.0
      %744 = vmatpush1.xpose.msra.mxu0 0.0
      %745 = vmatprep.subr.mxu0 0.0
      %746 = vmatpush1.xpose.msra.mxu0 0.0
      %747 = vmatprep.subr.mxu0 0.0
      %748 = vmatpush1.xpose.msra.mxu0 0.0
      %749 = vmatprep.subr.mxu0 0.0
      %750 = vmatpush1.xpose.msra.mxu0 0.0
      %751 = vmatprep.subr.mxu0 0.0
      %752 = vmatpush1.xpose.msra.mxu0 0.0
      %753 = vmatprep.subr.mxu0 0.0
      %754 = vmatpush1.xpose.msra.mxu0 0.0
      %755 = vmatprep.subr.mxu0 0.0
      %756 = vmatpush1.xpose.msra.mxu0 0.0
      %757 = vmatprep.subr.mxu0 0.0
      %758 = vmatpush1.xpose.msra.mxu0 0.0
      %759 = vmatprep.subr.mxu0 0.0
      %760 = vmatpush1.xpose.msra.mxu0 0.0
      %761 = vmatprep.subr.mxu0 0.0
      %762 = vmatpush1.xpose.msra.mxu0 0.0
      %763 = vmatprep.mubr.f32.mxu0 0.0
      %764 = vmatmul.mubr.f32.gmra.mrb[0].mxu0 %v694
      %v765 = vpop.f32.mrb[0].mxu0
      %v766 = vadd.f32 0.0, %v765
      %v767 = vpop.f32.mrb[0].mxu0
      %768 = vdwg.mxu0
      %v770 = vsel %vm692, %v447, 0
      %v773 = vsel %vm692, %v569, 0
      %775 = vmatprep.subr.mxu0 0.0
      %776 = vmatpush1.xpose.msra.mxu0 %v773
      %777 = vmatprep.subr.mxu0 0.0
      %778 = vmatpush1.xpose.msra.mxu0 0.0
      %779 = vmatprep.subr.mxu0 0.0
      %780 = vmatpush1.xpose.msra.mxu0 0.0
      %781 = vmatprep.subr.mxu0 0.0
      %782 = vmatpush1.xpose.msra.mxu0 0.0
      %783 = vmatprep.subr.mxu0 0.0
      %784 = vmatpush1.xpose.msra.mxu0 0.0
      %785 = vmatprep.subr.mxu0 0.0
      %786 = vmatpush1.xpose.msra.mxu0 0.0
      %787 = vmatprep.subr.mxu0 0.0
      %788 = vmatpush1.xpose.msra.mxu0 0.0
      %789 = vmatprep.subr.mxu0 0.0
      %790 = vmatpush1.xpose.msra.mxu0 0.0
      %791 = vmatprep.subr.mxu0 0.0
      %792 = vmatpush1.xpose.msra.mxu0 0.0
      %793 = vmatprep.subr.mxu0 0.0
      %794 = vmatpush1.xpose.msra.mxu0 0.0
      %795 = vmatprep.subr.mxu0 0.0
      %796 = vmatpush1.xpose.msra.mxu0 0.0
      %797 = vmatprep.subr.mxu0 0.0
      %798 = vmatpush1.xpose.msra.mxu0 0.0
      %799 = vmatprep.subr.mxu0 0.0
      %800 = vmatpush1.xpose.msra.mxu0 0.0
      %801 = vmatprep.subr.mxu0 0.0
      %802 = vmatpush1.xpose.msra.mxu0 0.0
      %803 = vmatprep.subr.mxu0 0.0
      %804 = vmatpush1.xpose.msra.mxu0 0.0
      %805 = vmatprep.subr.mxu0 0.0
      %806 = vmatpush1.xpose.msra.mxu0 0.0
      %807 = vmatprep.subr.mxu0 0.0
      %808 = vmatpush1.xpose.msra.mxu0 0.0
      %809 = vmatprep.subr.mxu0 0.0
      %810 = vmatpush1.xpose.msra.mxu0 0.0
      %811 = vmatprep.subr.mxu0 0.0
      %812 = vmatpush1.xpose.msra.mxu0 0.0
      %813 = vmatprep.subr.mxu0 0.0
      %814 = vmatpush1.xpose.msra.mxu0 0.0
      %815 = vmatprep.subr.mxu0 0.0
      %816 = vmatpush1.xpose.msra.mxu0 0.0
      %817 = vmatprep.subr.mxu0 0.0
      %818 = vmatpush1.xpose.msra.mxu0 0.0
      %819 = vmatprep.subr.mxu0 0.0
      %820 = vmatpush1.xpose.msra.mxu0 0.0
      %821 = vmatprep.subr.mxu0 0.0
      %822 = vmatpush1.xpose.msra.mxu0 0.0
      %823 = vmatprep.subr.mxu0 0.0
      %824 = vmatpush1.xpose.msra.mxu0 0.0
      %825 = vmatprep.subr.mxu0 0.0
      %826 = vmatpush1.xpose.msra.mxu0 0.0
      %827 = vmatprep.subr.mxu0 0.0
      %828 = vmatpush1.xpose.msra.mxu0 0.0
      %829 = vmatprep.subr.mxu0 0.0
      %830 = vmatpush1.xpose.msra.mxu0 0.0
      %831 = vmatprep.subr.mxu0 0.0
      %832 = vmatpush1.xpose.msra.mxu0 0.0
      %833 = vmatprep.subr.mxu0 0.0
      %834 = vmatpush1.xpose.msra.mxu0 0.0
      %835 = vmatprep.subr.mxu0 0.0
      %836 = vmatpush1.xpose.msra.mxu0 0.0
      %837 = vmatprep.subr.mxu0 0.0
      %838 = vmatpush1.xpose.msra.mxu0 0.0
      %839 = vmatprep.mubr.f32.mxu0 0.0
      %840 = vmatmul.mubr.f32.gmra.mrb[0].mxu0 %v770
      %v841 = vpop.f32.mrb[0].mxu0
      %v842 = vadd.f32 0.0, %v841
      %v843 = vpop.f32.mrb[0].mxu0
      %844 = vdwg.mxu0
      %v845 = vmul.f32 %v766, 0.5
      %v846 = vmul.f32 %v842, 0.5
      %v847 = vsel %vm254, %v845, -inf
      %848 = vmax.xlane.f32.xlu0 %v847
      %v849 = vpop.xlane.xlu0 %848
      %v850 = vsel %vm254, %v846, -inf
      %851 = vmax.xlane.f32.xlu0 %v850
      %v852 = vpop.xlane.xlu0 %851
      %v853 = vsub.f32 %v845, %v849
      %v854 = vsub.f32 %v846, %v852
      %v855 = vmul.f32 %v853, 1.442695
      %v856 = vpow.pop %v855
      %v857 = vmul.f32 %v854, 1.442695
      %v858 = vpow.pop %v857
      %v859 = vsel %vm254, %v856, 0.0
      %860 = vadd.xlane.f32.xlu0 %v859
      %v861 = vpop.xlane.xlu0 %860
      %v862 = vsel %vm254, %v858, 0.0
      %863 = vadd.xlane.f32.xlu0 %v862
      %v864 = vpop.xlane.xlu0 %863
      %v865 = vrcp.pop %v861
      %v866 = vrcp.pop %v864
      %v867 = vmul.f32 %v856, %v865
      %v868 = vmul.f32 %v858, %v866
      %v870 = vsel %vm254, %v867, 0
      %872 = vmatprep.subr.mxu0 0.0
      %873 = vmatpush1.msra.mxu0 %v690
      %874 = vmatprep.subr.mxu0 0.0
      %875 = vmatpush1.msra.mxu0 0.0
      %876 = vmatprep.subr.mxu0 0.0
      %877 = vmatpush1.msra.mxu0 0.0
      %878 = vmatprep.subr.mxu0 0.0
      %879 = vmatpush1.msra.mxu0 0.0
      %880 = vmatprep.subr.mxu0 0.0
      %881 = vmatpush1.msra.mxu0 0.0
      %882 = vmatprep.subr.mxu0 0.0
      %883 = vmatpush1.msra.mxu0 0.0
      %884 = vmatprep.subr.mxu0 0.0
      %885 = vmatpush1.msra.mxu0 0.0
      %886 = vmatprep.subr.mxu0 0.0
      %887 = vmatpush1.msra.mxu0 0.0
      %888 = vmatprep.subr.mxu0 0.0
      %889 = vmatpush1.msra.mxu0 0.0
      %890 = vmatprep.subr.mxu0 0.0
      %891 = vmatpush1.msra.mxu0 0.0
      %892 = vmatprep.subr.mxu0 0.0
      %893 = vmatpush1.msra.mxu0 0.0
      %894 = vmatprep.subr.mxu0 0.0
      %895 = vmatpush1.msra.mxu0 0.0
      %896 = vmatprep.subr.mxu0 0.0
      %897 = vmatpush1.msra.mxu0 0.0
      %898 = vmatprep.subr.mxu0 0.0
      %899 = vmatpush1.msra.mxu0 0.0
      %900 = vmatprep.subr.mxu0 0.0
      %901 = vmatpush1.msra.mxu0 0.0
      %902 = vmatprep.subr.mxu0 0.0
      %903 = vmatpush1.msra.mxu0 0.0
      %904 = vmatprep.subr.mxu0 0.0
      %905 = vmatpush1.msra.mxu0 0.0
      %906 = vmatprep.subr.mxu0 0.0
      %907 = vmatpush1.msra.mxu0 0.0
      %908 = vmatprep.subr.mxu0 0.0
      %909 = vmatpush1.msra.mxu0 0.0
      %910 = vmatprep.subr.mxu0 0.0
      %911 = vmatpush1.msra.mxu0 0.0
      %912 = vmatprep.subr.mxu0 0.0
      %913 = vmatpush1.msra.mxu0 0.0
      %914 = vmatprep.subr.mxu0 0.0
      %915 = vmatpush1.msra.mxu0 0.0
      %916 = vmatprep.subr.mxu0 0.0
      %917 = vmatpush1.msra.mxu0 0.0
      %918 = vmatprep.subr.mxu0 0.0
      %919 = vmatpush1.msra.mxu0 0.0
      %920 = vmatprep.subr.mxu0 0.0
      %921 = vmatpush1.msra.mxu0 0.0
      %922 = vmatprep.subr.mxu0 0.0
      %923 = vmatpush1.msra.mxu0 0.0
      %924 = vmatprep.subr.mxu0 0.0
      %925 = vmatpush1.msra.mxu0 0.0
      %926 = vmatprep.subr.mxu0 0.0
      %927 = vmatpush1.msra.mxu0 0.0
      %928 = vmatprep.subr.mxu0 0.0
      %929 = vmatpush1.msra.mxu0 0.0
      %930 = vmatprep.subr.mxu0 0.0
      %931 = vmatpush1.msra.mxu0 0.0
      %932 = vmatprep.subr.mxu0 0.0
      %933 = vmatpush1.msra.mxu0 0.0
      %934 = vmatprep.subr.mxu0 0.0
      %935 = vmatpush1.msra.mxu0 0.0
      %936 = vmatprep.mubr.f32.mxu0 0.0
      %937 = vmatmul.mubr.f32.gmra.mrb[0].mxu0 %v870
      %v938 = vpop.f32.mrb[0].mxu0
      %v939 = vadd.f32 0.0, %v938
      %v940 = vpop.f32.mrb[0].mxu0
      %941 = vdwg.mxu0
      %v943 = vsel %vm254, %v868, 0
      %945 = vmatprep.subr.mxu0 0.0
      %946 = vmatpush1.msra.mxu0 %v691
      %947 = vmatprep.subr.mxu0 0.0
      %948 = vmatpush1.msra.mxu0 0.0
      %949 = vmatprep.subr.mxu0 0.0
      %950 = vmatpush1.msra.mxu0 0.0
      %951 = vmatprep.subr.mxu0 0.0
      %952 = vmatpush1.msra.mxu0 0.0
      %953 = vmatprep.subr.mxu0 0.0
      %954 = vmatpush1.msra.mxu0 0.0
      %955 = vmatprep.subr.mxu0 0.0
      %956 = vmatpush1.msra.mxu0 0.0
      %957 = vmatprep.subr.mxu0 0.0
      %958 = vmatpush1.msra.mxu0 0.0
      %959 = vmatprep.subr.mxu0 0.0
      %960 = vmatpush1.msra.mxu0 0.0
      %961 = vmatprep.subr.mxu0 0.0
      %962 = vmatpush1.msra.mxu0 0.0
      %963 = vmatprep.subr.mxu0 0.0
      %964 = vmatpush1.msra.mxu0 0.0
      %965 = vmatprep.subr.mxu0 0.0
      %966 = vmatpush1.msra.mxu0 0.0
      %967 = vmatprep.subr.mxu0 0.0
      %968 = vmatpush1.msra.mxu0 0.0
      %969 = vmatprep.subr.mxu0 0.0
      %970 = vmatpush1.msra.mxu0 0.0
      %971 = vmatprep.subr.mxu0 0.0
      %972 = vmatpush1.msra.mxu0 0.0
      %973 = vmatprep.subr.mxu0 0.0
      %974 = vmatpush1.msra.mxu0 0.0
      %975 = vmatprep.subr.mxu0 0.0
      %976 = vmatpush1.msra.mxu0 0.0
      %977 = vmatprep.subr.mxu0 0.0
      %978 = vmatpush1.msra.mxu0 0.0
      %979 = vmatprep.subr.mxu0 0.0
      %980 = vmatpush1.msra.mxu0 0.0
      %981 = vmatprep.subr.mxu0 0.0
      %982 = vmatpush1.msra.mxu0 0.0
      %983 = vmatprep.subr.mxu0 0.0
      %984 = vmatpush1.msra.mxu0 0.0
      %985 = vmatprep.subr.mxu0 0.0
      %986 = vmatpush1.msra.mxu0 0.0
      %987 = vmatprep.subr.mxu0 0.0
      %988 = vmatpush1.msra.mxu0 0.0
      %989 = vmatprep.subr.mxu0 0.0
      %990 = vmatpush1.msra.mxu0 0.0
      %991 = vmatprep.subr.mxu0 0.0
      %992 = vmatpush1.msra.mxu0 0.0
      %993 = vmatprep.subr.mxu0 0.0
      %994 = vmatpush1.msra.mxu0 0.0
      %995 = vmatprep.subr.mxu0 0.0
      %996 = vmatpush1.msra.mxu0 0.0
      %997 = vmatprep.subr.mxu0 0.0
      %998 = vmatpush1.msra.mxu0 0.0
      %999 = vmatprep.subr.mxu0 0.0
      %1000 = vmatpush1.msra.mxu0 0.0
      %1001 = vmatprep.subr.mxu0 0.0
      %1002 = vmatpush1.msra.mxu0 0.0
      %1003 = vmatprep.subr.mxu0 0.0
      %1004 = vmatpush1.msra.mxu0 0.0
      %1005 = vmatprep.subr.mxu0 0.0
      %1006 = vmatpush1.msra.mxu0 0.0
      %1007 = vmatprep.subr.mxu0 0.0
      %1008 = vmatpush1.msra.mxu0 0.0
      %1009 = vmatprep.mubr.f32.mxu0 0.0
      %1010 = vmatmul.mubr.f32.gmra.mrb[0].mxu0 %v943
      %v1011 = vpop.f32.mrb[0].mxu0
      %v1012 = vadd.f32 0.0, %v1011
      %v1013 = vpop.f32.mrb[0].mxu0
      %1014 = vdwg.mxu0
      %v1015 = vcombine.high %v939, 0.0
      %v1017 = vunpack.c.l.s4 1983009808
      %v1018 = vunpack.c.0.s8 %v1017
      %v1019 = vlaneseq
      %v1020 = vshrl.u32 %v1019, 7
      %v1021 = vsub.s32 %v1018, %v1020
      %v1022 = vrot.slane %v939, %v1021
      %v1024 = vunpack.c.l.s4 1983009808
      %v1025 = vunpack.c.0.s8 %v1024
      %v1026 = vlaneseq
      %v1027 = vshrl.u32 %v1026, 7
      %v1028 = vsub.s32 %v1025, %v1027
      %v1029 = vrot.slane %v1015, %v1028
      %v1030 = vcombine.high %v1012, 0.0
      %v1032 = vunpack.c.l.s4 1983009808
      %v1033 = vunpack.c.0.s8 %v1032
      %v1034 = vlaneseq
      %v1035 = vshrl.u32 %v1034, 7
      %v1036 = vsub.s32 %v1033, %v1035
      %v1037 = vrot.slane %v1012, %v1036
      %v1039 = vunpack.c.l.s4 1983009808
      %v1040 = vunpack.c.0.s8 %v1039
      %v1041 = vlaneseq
      %v1042 = vshrl.u32 %v1041, 7
      %v1043 = vsub.s32 %v1040, %v1042
      %v1044 = vrot.slane %v1030, %v1043
      %v1045 = vcombine.low %v1022, %v1037
      %v1046 = vcombine.high %v1022, %v1037
      %v1048 = vunpack.c.l.s4 1934713408
      %v1049 = vunpack.c.0.s8 %v1048
      %v1050 = vlaneseq
      %v1051 = vshrl.u32 %v1050, 7
      %v1052 = vsub.s32 %v1049, %v1051
      %v1053 = vrot.slane %v1045, %v1052
      %v1055 = vunpack.c.l.s4 1934713408
      %v1056 = vunpack.c.0.s8 %v1055
      %v1057 = vlaneseq
      %v1058 = vshrl.u32 %v1057, 7
      %v1059 = vsub.s32 %v1056, %v1058
      %v1060 = vrot.slane %v1046, %v1059
      %v1061 = vcombine.low %v1029, %v1044
      %v1062 = vcombine.high %v1029, %v1044
      %v1064 = vunpack.c.l.s4 1934713408
      %v1065 = vunpack.c.0.s8 %v1064
      %v1066 = vlaneseq
      %v1067 = vshrl.u32 %v1066, 7
      %v1068 = vsub.s32 %v1065, %v1067
      %v1069 = vrot.slane %v1061, %v1068
      %v1071 = vunpack.c.l.s4 1934713408
      %v1072 = vunpack.c.0.s8 %v1071
      %v1073 = vlaneseq
      %v1074 = vshrl.u32 %v1073, 7
      %v1075 = vsub.s32 %v1072, %v1074
      %v1076 = vrot.slane %v1062, %v1075
      %v1077 = vcombine.high %v1053, 0.0
      %v1078 = vcombine.high %v1060, 0.0
      %v1079 = vcombine.high %v1069, 0.0
      %v1080 = vcombine.high %v1076, 0.0
      %v1081 = vcombine.low %v1053, %v1060
      %v1083 = vunpack.c.l.s4 1983009808
      %v1084 = vunpack.c.0.s8 %v1083
      %v1085 = vlaneseq
      %v1086 = vshrl.u32 %v1085, 7
      %v1087 = vsub.s32 %v1084, %v1086
      %v1088 = vrot.slane %v1081, %v1087
      %v1089 = vcombine.low %v1077, %v1078
      %v1091 = vunpack.c.l.s4 1983009808
      %v1092 = vunpack.c.0.s8 %v1091
      %v1093 = vlaneseq
      %v1094 = vshrl.u32 %v1093, 7
      %v1095 = vsub.s32 %v1092, %v1094
      %v1096 = vrot.slane %v1089, %v1095
      %v1097 = vcombine.low %v1069, %v1076
      %v1099 = vunpack.c.l.s4 1983009808
      %v1100 = vunpack.c.0.s8 %v1099
      %v1101 = vlaneseq
      %v1102 = vshrl.u32 %v1101, 7
      %v1103 = vsub.s32 %v1100, %v1102
      %v1104 = vrot.slane %v1097, %v1103
      %v1105 = vcombine.low %v1079, %v1080
      %v1107 = vunpack.c.l.s4 1983009808
      %v1108 = vunpack.c.0.s8 %v1107
      %v1109 = vlaneseq
      %v1110 = vshrl.u32 %v1109, 7
      %v1111 = vsub.s32 %v1108, %v1110
      %v1112 = vrot.slane %v1105, %v1111
      %v1113 = vcombine.low %v1088, %v1096
      %v1115 = vunpack.c.l.s4 1934713408
      %v1116 = vunpack.c.0.s8 %v1115
      %v1117 = vlaneseq
      %v1118 = vshrl.u32 %v1117, 7
      %v1119 = vsub.s32 %v1116, %v1118
      %v1120 = vrot.slane %v1113, %v1119
      %v1121 = vcombine.low %v1104, %v1112
      %v1123 = vunpack.c.l.s4 1934713408
      %v1124 = vunpack.c.0.s8 %v1123
      %v1125 = vlaneseq
      %v1126 = vshrl.u32 %v1125, 7
      %v1127 = vsub.s32 %v1124, %v1126
      %v1128 = vrot.slane %v1121, %v1127
      %v1129 = vcombine.low %v1120, %v1128
      %v1130 = vcombine.high %v1120, %v1128
      %1132 = vrot.lane.b32.xlu0 %v1130, 4
      %v1133 = vpop.permute.xlu0 %1132
      %v1135 = vsel %vm692, %v1129, %v1133
      %v1136 = vld [vmem:[%s2] sm:$0xff]
      %v1137 = vld [vmem:[%s5 + $0x1] sm:$0x1]
      %v1138 = vlaneseq
      %v1139 = vshrl.u32 %v1138, 7
      %v1140 = vsub.s32 0, %v1139
      %v1141 = vrot.slane %v1137, %v1140
      %v1143 = vsel %vm254, %v1135, 0
      %1145 = vmatprep.subr.mxu0 0.0
      %1146 = vmatpush1.msra.mxu0 %v1136
      %1147 = vmatprep.subr.mxu0 0.0
      %1148 = vmatpush1.msra.mxu0 0.0
      %1149 = vmatprep.subr.mxu0 0.0
      %1150 = vmatpush1.msra.mxu0 0.0
      %1151 = vmatprep.subr.mxu0 0.0
      %1152 = vmatpush1.msra.mxu0 0.0
      %1153 = vmatprep.subr.mxu0 0.0
      %1154 = vmatpush1.msra.mxu0 0.0
      %1155 = vmatprep.subr.mxu0 0.0
      %1156 = vmatpush1.msra.mxu0 0.0
      %1157 = vmatprep.subr.mxu0 0.0
      %1158 = vmatpush1.msra.mxu0 0.0
      %1159 = vmatprep.subr.mxu0 0.0
      %1160 = vmatpush1.msra.mxu0 0.0
      %1161 = vmatprep.subr.mxu0 0.0
      %1162 = vmatpush1.msra.mxu0 0.0
      %1163 = vmatprep.subr.mxu0 0.0
      %1164 = vmatpush1.msra.mxu0 0.0
      %1165 = vmatprep.subr.mxu0 0.0
      %1166 = vmatpush1.msra.mxu0 0.0
      %1167 = vmatprep.subr.mxu0 0.0
      %1168 = vmatpush1.msra.mxu0 0.0
      %1169 = vmatprep.subr.mxu0 0.0
      %1170 = vmatpush1.msra.mxu0 0.0
      %1171 = vmatprep.subr.mxu0 0.0
      %1172 = vmatpush1.msra.mxu0 0.0
      %1173 = vmatprep.subr.mxu0 0.0
      %1174 = vmatpush1.msra.mxu0 0.0
      %1175 = vmatprep.subr.mxu0 0.0
      %1176 = vmatpush1.msra.mxu0 0.0
      %1177 = vmatprep.subr.mxu0 0.0
      %1178 = vmatpush1.msra.mxu0 0.0
      %1179 = vmatprep.subr.mxu0 0.0
      %1180 = vmatpush1.msra.mxu0 0.0
      %1181 = vmatprep.subr.mxu0 0.0
      %1182 = vmatpush1.msra.mxu0 0.0
      %1183 = vmatprep.subr.mxu0 0.0
      %1184 = vmatpush1.msra.mxu0 0.0
      %1185 = vmatprep.subr.mxu0 0.0
      %1186 = vmatpush1.msra.mxu0 0.0
      %1187 = vmatprep.subr.mxu0 0.0
      %1188 = vmatpush1.msra.mxu0 0.0
      %1189 = vmatprep.subr.mxu0 0.0
      %1190 = vmatpush1.msra.mxu0 0.0
      %1191 = vmatprep.subr.mxu0 0.0
      %1192 = vmatpush1.msra.mxu0 0.0
      %1193 = vmatprep.subr.mxu0 0.0
      %1194 = vmatpush1.msra.mxu0 0.0
      %1195 = vmatprep.subr.mxu0 0.0
      %1196 = vmatpush1.msra.mxu0 0.0
      %1197 = vmatprep.subr.mxu0 0.0
      %1198 = vmatpush1.msra.mxu0 0.0
      %1199 = vmatprep.subr.mxu0 0.0
      %1200 = vmatpush1.msra.mxu0 0.0
      %1201 = vmatprep.subr.mxu0 0.0
      %1202 = vmatpush1.msra.mxu0 0.0
      %1203 = vmatprep.subr.mxu0 0.0
      %1204 = vmatpush1.msra.mxu0 0.0
      %1205 = vmatprep.subr.mxu0 0.0
      %1206 = vmatpush1.msra.mxu0 0.0
      %1207 = vmatprep.subr.mxu0 0.0
      %1208 = vmatpush1.msra.mxu0 0.0
      %1209 = vmatprep.mubr.f32.mxu0 0.0
      %1210 = vmatmul.mubr.f32.gmra.mrb[0].mxu0 %v1143
      %v1211 = vpop.f32.mrb[0].mxu0
      %v1212 = vadd.f32 %v1141, %v1211
      %v1213 = vpop.f32.mrb[0].mxu0
      %1214 = vdwg.mxu0
      %v1215 = vadd.f32 %v247, %v1212
      %v1216 = vld [vmem:[%s5 + $0x4] sm:$0x1]
      %v1217 = vld [vmem:[%s5 + $0x5] sm:$0x1]
      %v1218 = vsel %vm254, %v1215, 0.0
      %1219 = vadd.xlane.f32.xlu0 %v1218
      %v1220 = vpop.xlane.xlu0 %1219
      %v1221 = vrcp.pop 8.0
      %v1222 = vmul.f32 %v1220, %v1221
      %v1223 = vsub.f32 %v1215, %v1222
      %v1224 = vmul.f32 %v1223, %v1223
      %v1225 = vsel %vm254, %v1224, 0.0
      %1226 = vadd.xlane.f32.xlu0 %v1225
      %v1227 = vpop.xlane.xlu0 %1226
      %v1228 = vmul.f32 %v1227, 0.14285715
      %v1229 = vrsqrt.pop %v1228
      %v1230 = vmul.f32 %v1228, %v1229
      %vm1231 = vcmp.eq.f32.partialorder %v1228, inf
      %v1232 = vsel %vm1231, %v1228, %v1230
      %vm1233 = vcmp.eq.f32.partialorder %v1228, 0.0
      %v1234 = vand.u32 %v1228, 2147483648
      %v1235 = vsel %vm1233, %v1234, %v1232
      %v1236 = vadd.f32 %v1235, 1e-06
      %v1237 = vrcp.pop %v1236
      %v1238 = vmul.f32 %v1223, %v1237
      %v1239 = vlaneseq
      %v1240 = vshrl.u32 %v1239, 7
      %v1241 = vsub.s32 0, %v1240
      %v1242 = vrot.slane %v1216, %v1241
      %v1243 = vmul.f32 %v1238, %v1242
      %v1244 = vlaneseq
      %v1245 = vshrl.u32 %v1244, 7
      %v1246 = vsub.s32 0, %v1245
      %v1247 = vrot.slane %v1217, %v1246
      %v1248 = vadd.f32 %v1243, %v1247
      %v1249 = vld [vmem:[%s3] sm:$0xff]
      %v1250 = vld [vmem:[%s5 + $0x2] sm:$0x1]
      %v1251 = vlaneseq
      %v1252 = vshrl.u32 %v1251, 7
      %v1253 = vsub.s32 0, %v1252
      %v1254 = vrot.slane %v1250, %v1253
      %v1256 = vsel %vm254, %v1248, 0
      %1258 = vmatprep.subr.mxu0 0.0
      %1259 = vmatpush1.msra.mxu0 %v1249
      %1260 = vmatprep.subr.mxu0 0.0
      %1261 = vmatpush1.msra.mxu0 0.0
      %1262 = vmatprep.subr.mxu0 0.0
      %1263 = vmatpush1.msra.mxu0 0.0
      %1264 = vmatprep.subr.mxu0 0.0
      %1265 = vmatpush1.msra.mxu0 0.0
      %1266 = vmatprep.subr.mxu0 0.0
      %1267 = vmatpush1.msra.mxu0 0.0
      %1268 = vmatprep.subr.mxu0 0.0
      %1269 = vmatpush1.msra.mxu0 0.0
      %1270 = vmatprep.subr.mxu0 0.0
      %1271 = vmatpush1.msra.mxu0 0.0
      %1272 = vmatprep.subr.mxu0 0.0
      %1273 = vmatpush1.msra.mxu0 0.0
      %1274 = vmatprep.subr.mxu0 0.0
      %1275 = vmatpush1.msra.mxu0 0.0
      %1276 = vmatprep.subr.mxu0 0.0
      %1277 = vmatpush1.msra.mxu0 0.0
      %1278 = vmatprep.subr.mxu0 0.0
      %1279 = vmatpush1.msra.mxu0 0.0
      %1280 = vmatprep.subr.mxu0 0.0
      %1281 = vmatpush1.msra.mxu0 0.0
      %1282 = vmatprep.subr.mxu0 0.0
      %1283 = vmatpush1.msra.mxu0 0.0
      %1284 = vmatprep.subr.mxu0 0.0
      %1285 = vmatpush1.msra.mxu0 0.0
      %1286 = vmatprep.subr.mxu0 0.0
      %1287 = vmatpush1.msra.mxu0 0.0
      %1288 = vmatprep.subr.mxu0 0.0
      %1289 = vmatpush1.msra.mxu0 0.0
      %1290 = vmatprep.subr.mxu0 0.0
      %1291 = vmatpush1.msra.mxu0 0.0
      %1292 = vmatprep.subr.mxu0 0.0
      %1293 = vmatpush1.msra.mxu0 0.0
      %1294 = vmatprep.subr.mxu0 0.0
      %1295 = vmatpush1.msra.mxu0 0.0
      %1296 = vmatprep.subr.mxu0 0.0
      %1297 = vmatpush1.msra.mxu0 0.0
      %1298 = vmatprep.subr.mxu0 0.0
      %1299 = vmatpush1.msra.mxu0 0.0
      %1300 = vmatprep.subr.mxu0 0.0
      %1301 = vmatpush1.msra.mxu0 0.0
      %1302 = vmatprep.subr.mxu0 0.0
      %1303 = vmatpush1.msra.mxu0 0.0
      %1304 = vmatprep.subr.mxu0 0.0
      %1305 = vmatpush1.msra.mxu0 0.0
      %1306 = vmatprep.subr.mxu0 0.0
      %1307 = vmatpush1.msra.mxu0 0.0
      %1308 = vmatprep.subr.mxu0 0.0
      %1309 = vmatpush1.msra.mxu0 0.0
      %1310 = vmatprep.subr.mxu0 0.0
      %1311 = vmatpush1.msra.mxu0 0.0
      %1312 = vmatprep.subr.mxu0 0.0
      %1313 = vmatpush1.msra.mxu0 0.0
      %1314 = vmatprep.subr.mxu0 0.0
      %1315 = vmatpush1.msra.mxu0 0.0
      %1316 = vmatprep.subr.mxu0 0.0
      %1317 = vmatpush1.msra.mxu0 0.0
      %1318 = vmatprep.subr.mxu0 0.0
      %1319 = vmatpush1.msra.mxu0 0.0
      %1320 = vmatprep.subr.mxu0 0.0
      %1321 = vmatpush1.msra.mxu0 0.0
      %1322 = vmatprep.mubr.f32.mxu0 0.0
      %1323 = vmatmul.mubr.f32.gmra.mrb[0].mxu0 %v1256
      %v1324 = vpop.f32.mrb[0].mxu0
      %v1325 = vadd.f32 %v1254, %v1324
      %v1326 = vpop.f32.mrb[0].mxu0
      %1327 = vdwg.mxu0
      %v1328 = vmax.f32 %v1325, 0.0
      %v1329 = vld [vmem:[%s4] sm:$0xff]
      %v1330 = vld [vmem:[%s4 + $0x8] sm:$0xff]
      %v1331 = vld [vmem:[%s5 + $0x3] sm:$0x1]
      %v1332 = vlaneseq
      %v1333 = vshrl.u32 %v1332, 7
      %v1334 = vsub.s32 0, %v1333
      %v1335 = vrot.slane %v1331, %v1334
      %vm1336 = vcmask 130048
      %v1338 = vsel %vm1336, %v1328, 0
      %1340 = vmatprep.subr.mxu0 0.0
      %1341 = vmatpush1.msra.mxu0 %v1329
      %1342 = vmatprep.subr.mxu0 0.0
      %1343 = vmatpush1.msra.mxu0 %v1330
      %1344 = vmatprep.subr.mxu0 0.0
      %1345 = vmatpush1.msra.mxu0 0.0
      %1346 = vmatprep.subr.mxu0 0.0
      %1347 = vmatpush1.msra.mxu0 0.0
      %1348 = vmatprep.subr.mxu0 0.0
      %1349 = vmatpush1.msra.mxu0 0.0
      %1350 = vmatprep.subr.mxu0 0.0
      %1351 = vmatpush1.msra.mxu0 0.0
      %1352 = vmatprep.subr.mxu0 0.0
      %1353 = vmatpush1.msra.mxu0 0.0
      %1354 = vmatprep.subr.mxu0 0.0
      %1355 = vmatpush1.msra.mxu0 0.0
      %1356 = vmatprep.subr.mxu0 0.0
      %1357 = vmatpush1.msra.mxu0 0.0
      %1358 = vmatprep.subr.mxu0 0.0
      %1359 = vmatpush1.msra.mxu0 0.0
      %1360 = vmatprep.subr.mxu0 0.0
      %1361 = vmatpush1.msra.mxu0 0.0
      %1362 = vmatprep.subr.mxu0 0.0
      %1363 = vmatpush1.msra.mxu0 0.0
      %1364 = vmatprep.subr.mxu0 0.0
      %1365 = vmatpush1.msra.mxu0 0.0
      %1366 = vmatprep.subr.mxu0 0.0
      %1367 = vmatpush1.msra.mxu0 0.0
      %1368 = vmatprep.subr.mxu0 0.0
      %1369 = vmatpush1.msra.mxu0 0.0
      %1370 = vmatprep.subr.mxu0 0.0
      %1371 = vmatpush1.msra.mxu0 0.0
      %1372 = vmatprep.subr.mxu0 0.0
      %1373 = vmatpush1.msra.mxu0 0.0
      %1374 = vmatprep.subr.mxu0 0.0
      %1375 = vmatpush1.msra.mxu0 0.0
      %1376 = vmatprep.subr.mxu0 0.0
      %1377 = vmatpush1.msra.mxu0 0.0
      %1378 = vmatprep.subr.mxu0 0.0
      %1379 = vmatpush1.msra.mxu0 0.0
      %1380 = vmatprep.subr.mxu0 0.0
      %1381 = vmatpush1.msra.mxu0 0.0
      %1382 = vmatprep.subr.mxu0 0.0
      %1383 = vmatpush1.msra.mxu0 0.0
      %1384 = vmatprep.subr.mxu0 0.0
      %1385 = vmatpush1.msra.mxu0 0.0
      %1386 = vmatprep.subr.mxu0 0.0
      %1387 = vmatpush1.msra.mxu0 0.0
      %1388 = vmatprep.subr.mxu0 0.0
      %1389 = vmatpush1.msra.mxu0 0.0
      %1390 = vmatprep.subr.mxu0 0.0
      %1391 = vmatpush1.msra.mxu0 0.0
      %1392 = vmatprep.subr.mxu0 0.0
      %1393 = vmatpush1.msra.mxu0 0.0
      %1394 = vmatprep.subr.mxu0 0.0
      %1395 = vmatpush1.msra.mxu0 0.0
      %1396 = vmatprep.subr.mxu0 0.0
      %1397 = vmatpush1.msra.mxu0 0.0
      %1398 = vmatprep.subr.mxu0 0.0
      %1399 = vmatpush1.msra.mxu0 0.0
      %1400 = vmatprep.subr.mxu0 0.0
      %1401 = vmatpush1.msra.mxu0 0.0
      %1402 = vmatprep.subr.mxu0 0.0
      %1403 = vmatpush1.msra.mxu0 0.0
      %1404 = vmatprep.mubr.f32.mxu0 0.0
      %1405 = vmatmul.mubr.f32.gmra.mrb[0].mxu0 %v1338
      %v1406 = vpop.f32.mrb[0].mxu0
      %v1407 = vadd.f32 %v1335, %v1406
      %v1408 = vpop.f32.mrb[0].mxu0
      %1409 = vdwg.mxu0
      %v1410 = vadd.f32 %v1248, %v1407
      %v1411 = vld [vmem:[%s5 + $0x6] sm:$0x1]
      %v1412 = vld [vmem:[%s5 + $0x7] sm:$0x1]
      %v1413 = vsel %vm254, %v1410, 0.0
      %1414 = vadd.xlane.f32.xlu0 %v1413
      %v1415 = vpop.xlane.xlu0 %1414
      %v1416 = vmul.f32 %v1415, %v1221
      %v1417 = vsub.f32 %v1410, %v1416
      %v1418 = vmul.f32 %v1417, %v1417
      %v1419 = vsel %vm254, %v1418, 0.0
      %1420 = vadd.xlane.f32.xlu0 %v1419
      %v1421 = vpop.xlane.xlu0 %1420
      %v1422 = vmul.f32 %v1421, 0.14285715
      %v1423 = vrsqrt.pop %v1422
      %v1424 = vmul.f32 %v1422, %v1423
      %vm1425 = vcmp.eq.f32.partialorder %v1422, inf
      %v1426 = vsel %vm1425, %v1422, %v1424
      %vm1427 = vcmp.eq.f32.partialorder %v1422, 0.0
      %v1428 = vand.u32 %v1422, 2147483648
      %v1429 = vsel %vm1427, %v1428, %v1426
      %v1430 = vadd.f32 %v1429, 1e-06
      %v1431 = vrcp.pop %v1430
      %v1432 = vmul.f32 %v1417, %v1431
      %v1433 = vlaneseq
      %v1434 = vshrl.u32 %v1433, 7
      %v1435 = vsub.s32 0, %v1434
      %v1436 = vrot.slane %v1411, %v1435
      %v1437 = vmul.f32 %v1432, %v1436
      %v1438 = vlaneseq
      %v1439 = vshrl.u32 %v1438, 7
      %v1440 = vsub.s32 0, %v1439
      %v1441 = vrot.slane %v1412, %v1440
      %v1442 = vadd.f32 %v1437, %v1441
      %1443 = vst.msk [vmem:[%s246] sm:$0xff] %vm254, %v1442
      %p1444 = scmp.lt.s32.totalorder %s17, 1
      %s1445 = scalar_select %p1444, %s17, 1
      %s1446 = smul.addr %s1445, 8
      %s1447 = scalar_lea.vmem %s6, %s1446
      // Predicated region
      $region45: #{tpu_custom_call.1} parent=43 // pred_check
        %p1448 = pneg %p166
      $region46: #{tpu_custom_call.1} parent=43 // pred_check_branch
        %1450 = sbr.rel (%p1448) target = $region48
      $region47: #{tpu_custom_call.1} parent=43 // pred_region
        _
      $region48: #{tpu_custom_call.1} parent=43 // pred_fallthru
        _
    $region44: #{tpu_custom_call.1} parent=5 // pred_fallthru
      _
    %p1451 = scmp.le.s32.totalorder 2, %s12
    // Predicated region
    $region49: #{tpu_custom_call.1} parent=5 // pred_check
      %p1452 = pneg %p1451
    $region50: #{tpu_custom_call.1} parent=5 // pred_check_branch
      %1454 = sbr.rel (%p1452) target = $region52
    $region51: #{tpu_custom_call.1} parent=5 // pred_region
      %s1455 = ssub.s32 %s12, 2
      // Predicated region
      $region53: #{tpu_custom_call.1} parent=51 // pred_check
        %p1456 = pneg %p172
      $region54: #{tpu_custom_call.1} parent=51 // pred_check_branch
        %1458 = sbr.rel (%p1456) target = $region56
      $region55: #{tpu_custom_call.1} parent=51 // pred_region
        %p1459 = scmp.lt.s32.totalorder %s18, 1
        %s1460 = scalar_select %p1459, %s18, 1
        %s1461 = smul.addr %s1460, 8
        %s1462 = scalar_lea.vmem %s6, %s1461
      $region56: #{tpu_custom_call.1} parent=51 // pred_fallthru
        _
    $region52: #{tpu_custom_call.1} parent=5 // pred_fallthru
      _
  $region6: #{tpu_custom_call.1} parent=0 // loop_footer
    %s16 = sadd.s32 1, %s12
  $region7: #{tpu_custom_call.1} parent=0 // loop_footer_branch
    %11 = sbr.rel target = $region3
  $region8: #{tpu_custom_call.1} parent=0 // loop_exit
    _

</llo_original>
